<compile_context>
chip_gen: v5e
topology: v5e:2x2
jax: 0.10.0
libtpu: 0.0.40
codegen_flags: <defaults>
</compile_context>

<pallas_src>
import functools

import jax
import jax.numpy as jnp
from jax.experimental import pallas as pl
from jax.experimental.pallas import tpu as pltpu

_PALLAS_MIN_BYTES = 2 * 1024 * 1024          # below this, fused XLA `w * x` wins
_LANE_CANDIDATES = (8192, 4096, 2048, 1024, 512, 256, 128)


def _sublane_multiple(dtype):
    """(8,128) tiling generalizes to (8*packing, 128) for sub-32-bit dtypes."""
    itemsize = jnp.dtype(dtype).itemsize
    return 8 * max(1, 4 // itemsize)


@functools.lru_cache(maxsize=None)
def _tpu_config():
    """Per-generation single-buffer tile budget (bytes) and compiler knobs."""
    try:
        kind = jax.devices()[0].device_kind.lower()
    except Exception:  # pragma: no cover - defensive, e.g. no devices yet
        kind = ""
    if "v7" in kind or "7x" in kind:
        # 64 MiB VMEM, ~3.2 TB/s, 2 TCs: 8 MiB tiles -> 4 x 8 MiB = 32 MiB
        # double-buffered footprint (half of physical VMEM); split grid across
        # both TensorCores so both DMA paths pull from HBM.
        return {"tile_bytes": 8 << 20, "vmem_limit": 48 << 20, "core_parallel": True}
    if "v6" in kind:
        # 128 MiB VMEM, ~1.4 TB/s: spend the free headroom on tile size.
        return {"tile_bytes": 8 << 20, "vmem_limit": 96 << 20, "core_parallel": False}
    if "v5" in kind:
        # ~0.8 TB/s: 2 MiB tiles already amortize the ~0.35 us/step overhead;
        # just make the scoped-VMEM window explicit so internal scratch can't
        # trip the 16 MiB default.
        return {"tile_bytes": 2 << 20, "vmem_limit": 24 << 20, "core_parallel": False}
    # Unknown / older chips: conservative tiles, leave scoped VMEM at default.
    return {"tile_bytes": 2 << 20, "vmem_limit": None, "core_parallel": False}


def _scale_kernel(w_ref, x_ref, o_ref):
    # w_ref: (1,) f32 scalar in SMEM; x_ref / o_ref: (tm, L) VMEM tiles.
    # Multiply in f32 registers (free at mem-bound; avoids relying on a bf16
    # VALU on v5e) and cast back -> HBM traffic stays at the input dtype width.
    w = w_ref[0]
    o_ref[...] = (w * x_ref[...].astype(jnp.float32)).astype(o_ref.dtype)


def _pallas_scale_slab(w_f32, x2d, *, donate_x=False):
    M, L = x2d.shape
    cfg = _tpu_config()
    itemsize = jnp.dtype(x2d.dtype).itemsize
    sub = _sublane_multiple(x2d.dtype)

    # Largest sublane tile (multiple of `sub`) within the per-buffer budget,
    # or the full extent if the whole slab is smaller than one tile.
    tm_target = max(sub, (cfg["tile_bytes"] // (L * itemsize)) // sub * sub)
    tm = M if M <= tm_target else tm_target
    grid = (pl.cdiv(M, tm),)

    if cfg["core_parallel"] and grid[0] >= 2:
        dim_sem = (pltpu.CORE_PARALLEL,)      # shard the grid across v7x's 2 TCs
    else:
        dim_sem = ("parallel",)

    compiler_kwargs = {"dimension_semantics": dim_sem}
    if cfg["vmem_limit"] is not None:
        compiler_kwargs["vmem_limit_bytes"] = cfg["vmem_limit"]

    nbytes = int(x2d.size) * itemsize
    return pl.pallas_call(
        _scale_kernel,
        out_shape=jax.ShapeDtypeStruct((M, L), x2d.dtype),
        grid_spec=pltpu.PrefetchScalarGridSpec(
            num_scalar_prefetch=0,
            grid=grid,
            in_specs=[
                pl.BlockSpec(memory_space=pltpu.SMEM),        # scalar weight
                pl.BlockSpec((tm, L), lambda i: (i, 0)),      # contiguous row slab
            ],
            out_specs=pl.BlockSpec((tm, L), lambda i: (i, 0)),
        ),
        compiler_params=pltpu.CompilerParams(**compiler_kwargs),
        cost_estimate=pl.CostEstimate(
            flops=int(x2d.size), transcendentals=0,
            bytes_accessed=2 * nbytes + 4),
        input_output_aliases=({1: 0} if donate_x else {}),
    )(w_f32, x2d)


def linear_regression_forward(w, x, *, donate_x=False):
    """Pallas TPU implementation of LinearRegression.forward: `self.w * x`.

    Floating x keeps its native dtype end-to-end (bf16 in -> bf16 out);
    integer / tiny / non-lane-dense inputs use the fused XLA multiply.
    """
    x = jnp.asarray(x)
    w = jnp.asarray(w)

    # Non-floating x (e.g. the module's x = [1, 2, 3]) and small arrays: XLA's
    # fused broadcast-multiply is already at roofline; Pallas launch + pipeline
    # warmup would only add overhead.
    if (not jnp.issubdtype(x.dtype, jnp.floating)
            or x.size * x.dtype.itemsize < _PALLAS_MIN_BYTES):
        return w * x

    n = int(x.size)
    lane = next((l for l in _LANE_CANDIDATES if n % l == 0), None)
    if lane is None:
        # Can't be presented lane-dense without masked partial stores.
        return w * x

    # Flatten + re-chunk into a contiguous lane-dense slab (last dim a large
    # multiple of 128), independent of the original rank: 1-D grid over the
    # sublane axis, contiguous row-major DMAs, unmasked full-width stores.
    x2d = x.reshape(n // lane, lane)
    w_f32 = jnp.asarray(w, jnp.float32).reshape(1)
    out = _pallas_scale_slab(w_f32, x2d, donate_x=donate_x)
    return out.reshape(x.shape)


def mse_loss(y, y_pred):
    # Plain-JAX glue mirroring LinearRegression.loss (not the hot path).
    return jnp.mean((y - y_pred) ** 2)


if __name__ == "__main__":
    key = jax.random.PRNGKey(0)

    # 8 MiB f32 slab -> exercises the tiled Pallas path (re-chunked to lanes=8192).
    x = jax.random.normal(key, (512, 4096), dtype=jnp.float32)

    # Module __init__: w = torch.tensor(0.0)
    w0 = jnp.float32(0.0)
    y0 = jax.block_until_ready(linear_regression_forward(w0, x))
    assert y0.shape == x.shape and y0.dtype == x.dtype
    assert jnp.array_equal(y0, w0 * x)

    # Nonzero weight to verify the multiply actually happens.
    w1 = jnp.float32(2.5)
    y1 = jax.block_until_ready(linear_regression_forward(w1, x))
    assert jnp.array_equal(y1, w1 * x)

    # bf16 stays bf16 end-to-end (half the HBM traffic of an f32 upcast).
    xb = x.astype(jnp.bfloat16)
    yb = jax.block_until_ready(linear_regression_forward(w1, xb))
    assert yb.dtype == jnp.bfloat16
    assert jnp.array_equal(yb, (w1 * xb.astype(jnp.float32)).astype(jnp.bfloat16))

    # Large but non-lane-dense element count -> routed to the jnp fallback.
    x_odd = jax.random.normal(key, (701, 1001), dtype=jnp.float32)
    y_odd = jax.block_until_ready(linear_regression_forward(w1, x_odd))
    assert jnp.array_equal(y_odd, w1 * x_odd)

    # Tiny integer path mirroring the module's x = [1, 2, 3].
    x_small = jnp.asarray([1, 2, 3], jnp.int32)
    y_small = jax.block_until_ready(linear_regression_forward(w1, x_small))
    assert jnp.allclose(y_small, jnp.asarray([2.5, 5.0, 7.5]))

    _ = mse_loss(jnp.asarray([4.0, 7.0, 11.0], jnp.float32), y_small)

    # TODO(synk): training/autograd (requires_grad on w) is out of scope for a
    # forward-pass kernel; loss() is provided as plain JAX.
    print("KERNEL_OK")
</pallas_src>

<mosaic_0001>
module attributes {stable_mosaic.version = 11 : i64} {
  func.func @_scale_kernel(%arg0: i32, %arg1: memref<1xf32, #tpu.memory_space<smem>>, %arg2: memref<64x8192xf32, #tpu.memory_space<vmem>>, %arg3: memref<64x8192xf32, #tpu.memory_space<vmem>>) attributes {dimension_semantics = [#tpu.dimension_semantics<parallel>], iteration_bounds = array<i64: 4>, scalar_prefetch = 0 : i64, scratch_operands = 0 : i64, tpu.core_type = #tpu.core_type<tc>, window_params = [{transform_indices = @transform_0, window_bounds = array<i64: 1>}, {transform_indices = @transform_1, window_bounds = array<i64: 64, 8192>}, {transform_indices = @transform_2, window_bounds = array<i64: 64, 8192>}]} {
    %c0 = arith.constant 0 : index
    %0 = memref.load %arg1[%c0] : memref<1xf32, #tpu.memory_space<smem>>
    %c0_0 = arith.constant 0 : index
    %c0_1 = arith.constant 0 : index
    %1 = vector.load %arg2[%c0_0, %c0_1] : memref<64x8192xf32, #tpu.memory_space<vmem>>, vector<64x8192xf32>
    %2 = vector.broadcast %0 : f32 to vector<64x8192xf32>
    %3 = arith.mulf %2, %1 : vector<64x8192xf32>
    %c0_2 = arith.constant 0 : index
    %c0_3 = arith.constant 0 : index
    %4 = vector.load %arg3[%c0_2, %c0_3] : memref<64x8192xf32, #tpu.memory_space<vmem>>, vector<64x8192xf32>
    tpu.vector_store %arg3[%c0_2, %c0_3], %3 {strides = array<i32>} : memref<64x8192xf32, #tpu.memory_space<vmem>>, vector<64x8192xf32>,
    return
  }
  func.func @transform_0(%arg0: i32) -> i32 {
    %c0_i32 = arith.constant 0 : i32
    %c0_i32_0 = arith.constant 0 : i32
    return %c0_i32 : i32
  }
  func.func @transform_1(%arg0: i32) -> (i32, i32) {
    %c0_i32 = arith.constant 0 : i32
    %c0_i32_0 = arith.constant 0 : i32
    return %arg0, %c0_i32 : i32, i32
  }
  func.func @transform_2(%arg0: i32) -> (i32, i32) {
    %c0_i32 = arith.constant 0 : i32
    %c0_i32_0 = arith.constant 0 : i32
    return %arg0, %c0_i32 : i32, i32
  }
}

</mosaic_0001>

<llo_original>
// kernel: tpu_custom_call.1
$region0: #{tpu_custom_call.1}
  #allocation0 [shape = 'u32[]', space=smem, size = 0x4, offset = 0x4, fixed_abs, tag = 'smem constant byte address 0x4 - core index']
  #allocation1 [shape = 'u32[72,128]{1,0:T(1,128)}', space=vmem, size = 0x9000, scoped, tag = 'internal scratch']
  #allocation2 [shape = 'f32[1]{0:T(128)S(6)}', space=smem, size = 0x200, scoped, tag = 'scoped memory for tpu_custom_call.1']
  %s0 = inlined_call_operand.<no memory space> [shape: f32[1], index: 0, kind: input, shape index: {}]
  %s1 = inlined_call_operand.hbm [shape: f32[256,8192], index: 1, kind: input, shape index: {}]
  %s2 = inlined_call_operand.hbm [shape: f32[256,8192], index: 2, kind: output, shape index: {}]
  %s3 = sld [smem:[#allocation0]]
  $region45: #{tpu_custom_call.1} parent=0
    _
  %s5 = ssub.s32 1, %s3
  %s6 = scalar_select 0, %s5, %s3
  %7 = sst [smem:[#allocation2]] %s0
  $region1: #{tpu_custom_call.1} parent=0
    #allocation3 [shape = 'u8[4194304]{0}', space=vmem, size = 0x400000, scoped, tag = 'input window, operand 1']
    #allocation4 [shape = 's32[2]{0}', space=sflag, size = 0x8, scoped, tag = 'scoped memory for tpu_custom_call.1']
    #allocation5 [shape = 's32[2]{0}', space=sflag, size = 0x8, scoped, tag = 'scoped memory for tpu_custom_call.1']
    #allocation6 [shape = 'u8[4194304]{0}', space=vmem, size = 0x400000, scoped, tag = 'output window, operand 0']
    %8 = vsyncpa [#allocation4], 0
    %s9 = scalar_lea.sflag [#allocation4], 1
    %10 = vsyncpa %s9, 0
    %11 = vsyncpa [#allocation5], 0
    %s12 = scalar_lea.sflag [#allocation5], 1
    %13 = vsyncpa %s12, 0
    loop: start=0, step=1, limit=6
    $region2: #{tpu_custom_call.1} parent=1 // loop_pre_header
      _
    $region3: #{tpu_custom_call.1} parent=1 // loop_header
      %s15 = sphi 0, %s19
      %p16 = scmp.ge.s32.totalorder %s15, 6
      %s23 = sphi 0, %s23
      %s25 = sphi 0, %s23
      %s26 = sphi 0, %s25
      %s40 = sphi 0, %s26
      %s46 = sphi 0, %s48
      %s49 = sphi 0, %s46
      %s50 = sphi 0, %s49
      %s66 = sphi 0, %s50
      %s72 = sphi 0, %s74
      %s75 = sphi 0, %s72
      %s76 = sphi 0, %s75
      %s92 = sphi 0, %s76
    $region4: #{tpu_custom_call.1} parent=1 // loop_header_branch
      %18 = sbr.rel (%p16) target = $region8
    $region5: #{tpu_custom_call.1} parent=1 // loop_body
      %s20 = ssub.s32 %s15, 1
      %s21 = ssub.s32 %s15, 2
      %s22 = sadd.s32 %s15, 1
      %s24 = sadd.s32 %s23, 1
      %p27 = scmp.eq.s32.totalorder %s15, 3
      %p28 = scmp.ne.s32.totalorder %s23, %s25
      %p29 = scmp.eq.s32.totalorder %s15, 0
      %p30 = por %p28, %p29
      %p31 = scmp.ne.s32.totalorder %s23, %s25
      %p32 = scmp.eq.s32.totalorder %s20, 3
      %p33 = por %p31, %p32
      %p34 = scmp.ne.s32.totalorder %s25, %s26
      %p35 = scmp.eq.s32.totalorder %s20, 0
      %p36 = por %p34, %p35
      %p37 = scmp.ne.s32.totalorder %s25, %s26
      %p38 = scmp.eq.s32.totalorder %s21, 3
      %p39 = por %p37, %p38
      %p41 = scmp.ne.s32.totalorder %s26, %s40
      %p42 = scmp.eq.s32.totalorder %s21, 0
      %p43 = por %p41, %p42
      %s44 = ssub.s32 %s15, %s22
      %p45 = scmp.eq.s32.totalorder %s44, 0
      %s47 = sadd.s32 %s46, 1
      %s48 = scalar_select %p45, %s46, %s47
      %p51 = pneg %p45
      %p52 = scmp.eq.s32.totalorder %s15, 3
      %p53 = por %p51, %p52
      %p54 = scmp.ne.s32.totalorder %s46, %s49
      %p55 = scmp.eq.s32.totalorder %s15, 0
      %p56 = por %p54, %p55
      %p57 = scmp.ne.s32.totalorder %s46, %s49
      %p58 = scmp.eq.s32.totalorder %s20, 3
      %p59 = por %p57, %p58
      %p60 = scmp.ne.s32.totalorder %s49, %s50
      %p61 = scmp.eq.s32.totalorder %s20, 0
      %p62 = por %p60, %p61
      %p63 = scmp.ne.s32.totalorder %s49, %s50
      %p64 = scmp.eq.s32.totalorder %s21, 3
      %p65 = por %p63, %p64
      %p67 = scmp.ne.s32.totalorder %s50, %s66
      %p68 = scmp.eq.s32.totalorder %s21, 0
      %p69 = por %p67, %p68
      %s70 = ssub.s32 %s15, %s22
      %p71 = scmp.eq.s32.totalorder %s70, 0
      %s73 = sadd.s32 %s72, 1
      %s74 = scalar_select %p71, %s72, %s73
      %p77 = pneg %p71
      %p78 = scmp.eq.s32.totalorder %s15, 3
      %p79 = por %p77, %p78
      %p80 = scmp.ne.s32.totalorder %s72, %s75
      %p81 = scmp.eq.s32.totalorder %s15, 0
      %p82 = por %p80, %p81
      %p83 = scmp.ne.s32.totalorder %s72, %s75
      %p84 = scmp.eq.s32.totalorder %s20, 3
      %p85 = por %p83, %p84
      %p86 = scmp.ne.s32.totalorder %s75, %s76
      %p87 = scmp.eq.s32.totalorder %s20, 0
      %p88 = por %p86, %p87
      %p89 = scmp.ne.s32.totalorder %s75, %s76
      %p90 = scmp.eq.s32.totalorder %s21, 3
      %p91 = por %p89, %p90
      %p93 = scmp.ne.s32.totalorder %s76, %s92
      %p94 = scmp.eq.s32.totalorder %s21, 0
      %p95 = por %p93, %p94
      %p96 = scmp.le.s32.totalorder 1, %s15
      %p97 = scmp.lt.s32.totalorder %s15, 5
      %p98 = pnand %p96, %p97
      %p99 = pneg %p98
      // Predicated region
      $region9: #{tpu_custom_call.1} parent=5 // pred_check
        _
      $region10: #{tpu_custom_call.1} parent=5 // pred_check_branch
        %101 = sbr.rel (%p98) target = $region12
      $region11: #{tpu_custom_call.1} parent=5 // pred_region
        %s102 = ssub.s32 %s15, 1
        // Predicated region
        $region13: #{tpu_custom_call.1} parent=11 // pred_check
          %p103 = pneg %p36
        $region14: #{tpu_custom_call.1} parent=11 // pred_check_branch
          %105 = sbr.rel (%p103) target = $region16
        $region15: #{tpu_custom_call.1} parent=11 // pred_region
          _
        $region16: #{tpu_custom_call.1} parent=11 // pred_fallthru
          _
      $region12: #{tpu_custom_call.1} parent=5 // pred_fallthru
        _
      %p106 = scmp.lt.s32.totalorder %s15, 4
      // Predicated region
      $region17: #{tpu_custom_call.1} parent=5 // pred_check
        %p107 = pneg %p106
      $region18: #{tpu_custom_call.1} parent=5 // pred_check_branch
        %109 = sbr.rel (%p107) target = $region20
      $region19: #{tpu_custom_call.1} parent=5 // pred_region
        // Predicated region
        $region21: #{tpu_custom_call.1} parent=19 // pred_check
          %p110 = pneg %p56
        $region22: #{tpu_custom_call.1} parent=19 // pred_check_branch
          %112 = sbr.rel (%p110) target = $region24
        $region23: #{tpu_custom_call.1} parent=19 // pred_region
          %s113 = sand.u32 %s46, 1
          %s114 = scalar_lea.sflag [#allocation4], %s113
          %s115 = sand.u32 %s46, 1
          %s116 = smul.addr %s115, 4096
          %s117 = scalar_lea.vmem [#allocation3], %s116
          %s118 = smul.u32 8, %s15
          %120 = vsyncadd %s114, 0
          %s121 = smul.addr %s118, 64
          %s122 = smul.addr %s121, 8
          %s123 = scalar_lea.hbm %s1, %s122
          %s124 = sshll.u32 %s123, 4
          %s125 = int_to_ptr.hbm [resolvable:$true] %s124
          %s126 = sshll.u32 %s117, 4
          %s127 = int_to_ptr.vmem [resolvable:$true] %s126
          %132 = dma.hbm_to_vmem [thread:$0]  %s125, 65536, %s127, %s114, 8192, 8192, 512
        $region24: #{tpu_custom_call.1} parent=19 // pred_fallthru
          _
      $region20: #{tpu_custom_call.1} parent=5 // pred_fallthru
        _
      %p133 = scmp.le.s32.totalorder 1, %s15
      %p134 = scmp.lt.s32.totalorder %s15, 5
      %p135 = pnand %p133, %p134
      %p136 = pneg %p135
      // Predicated region
      $region25: #{tpu_custom_call.1} parent=5 // pred_check
        _
      $region26: #{tpu_custom_call.1} parent=5 // pred_check_branch
        %138 = sbr.rel (%p135) target = $region28
      $region27: #{tpu_custom_call.1} parent=5 // pred_region
        %s139 = ssub.s32 %s15, 1
        %s140 = sand.u32 %s49, 1
        %s141 = scalar_lea.sflag [#allocation4], %s140
        %s142 = sand.u32 %s49, 1
        %s143 = smul.addr %s142, 4096
        %s144 = scalar_lea.vmem [#allocation3], %s143
        // Predicated region
        $region29: #{tpu_custom_call.1} parent=27 // pred_check
          %p145 = pneg %p62
        $region30: #{tpu_custom_call.1} parent=27 // pred_check_branch
          %147 = sbr.rel (%p145) target = $region32
        $region31: #{tpu_custom_call.1} parent=27 // pred_region
          %149 = dma.done %s141, 65536
        $region32: #{tpu_custom_call.1} parent=27 // pred_fallthru
          _
        %p150 = pneg %p36
        %p151 = pneg %p33
        %s152 = sand.u32 %s49, 1
        %s153 = scalar_lea.sflag [#allocation4], %s152
        %s154 = sand.u32 %s49, 1
        %s155 = smul.addr %s154, 4096
        %s156 = scalar_lea.vmem [#allocation3], %s155
        %p157 = pneg %p62
        %p158 = pneg %p59
        %p159 = pneg %p88
        %p160 = pneg %p85
        %s161 = sand.u32 %s75, 1
        %s162 = scalar_lea.sflag [#allocation5], %s161
        %s163 = sand.u32 %s75, 1
        %s164 = smul.addr %s163, 4096
        %s165 = scalar_lea.vmem [#allocation6], %s164
        %s166 = smul.u32 8, %s20
        %s167 = smul.u32 8, %s20
        %s168 = sld [smem:[#allocation2]]
        %v169 = vld [vmem:[%s144] sm:$0xff]
        %v170 = vld [vmem:[%s144 + $0x8] sm:$0xff]
        %v171 = vld [vmem:[%s144 + $0x10] sm:$0xff]
        %v172 = vld [vmem:[%s144 + $0x18] sm:$0xff]
        %v173 = vld [vmem:[%s144 + $0x20] sm:$0xff]
        %v174 = vld [vmem:[%s144 + $0x28] sm:$0xff]
        %v175 = vld [vmem:[%s144 + $0x30] sm:$0xff]
        %v176 = vld [vmem:[%s144 + $0x38] sm:$0xff]
        %v177 = vld [vmem:[%s144 + $0x40] sm:$0xff]
        %v178 = vld [vmem:[%s144 + $0x48] sm:$0xff]
        %v179 = vld [vmem:[%s144 + $0x50] sm:$0xff]
        %v180 = vld [vmem:[%s144 + $0x58] sm:$0xff]
        %v181 = vld [vmem:[%s144 + $0x60] sm:$0xff]
        %v182 = vld [vmem:[%s144 + $0x68] sm:$0xff]
        %v183 = vld [vmem:[%s144 + $0x70] sm:$0xff]
        %v184 = vld [vmem:[%s144 + $0x78] sm:$0xff]
        %v185 = vld [vmem:[%s144 + $0x80] sm:$0xff]
        %v186 = vld [vmem:[%s144 + $0x88] sm:$0xff]
        %v187 = vld [vmem:[%s144 + $0x90] sm:$0xff]
        %v188 = vld [vmem:[%s144 + $0x98] sm:$0xff]
        %v189 = vld [vmem:[%s144 + $0xa0] sm:$0xff]
        %v190 = vld [vmem:[%s144 + $0xa8] sm:$0xff]
        %v191 = vld [vmem:[%s144 + $0xb0] sm:$0xff]
        %v192 = vld [vmem:[%s144 + $0xb8] sm:$0xff]
        %v193 = vld [vmem:[%s144 + $0xc0] sm:$0xff]
        %v194 = vld [vmem:[%s144 + $0xc8] sm:$0xff]
        %v195 = vld [vmem:[%s144 + $0xd0] sm:$0xff]
        %v196 = vld [vmem:[%s144 + $0xd8] sm:$0xff]
        %v197 = vld [vmem:[%s144 + $0xe0] sm:$0xff]
        %v198 = vld [vmem:[%s144 + $0xe8] sm:$0xff]
        %v199 = vld [vmem:[%s144 + $0xf0] sm:$0xff]
        %v200 = vld [vmem:[%s144 + $0xf8] sm:$0xff]
        %v201 = vld [vmem:[%s144 + $0x100] sm:$0xff]
        %v202 = vld [vmem:[%s144 + $0x108] sm:$0xff]
        %v203 = vld [vmem:[%s144 + $0x110] sm:$0xff]
        %v204 = vld [vmem:[%s144 + $0x118] sm:$0xff]
        %v205 = vld [vmem:[%s144 + $0x120] sm:$0xff]
        %v206 = vld [vmem:[%s144 + $0x128] sm:$0xff]
        %v207 = vld [vmem:[%s144 + $0x130] sm:$0xff]
        %v208 = vld [vmem:[%s144 + $0x138] sm:$0xff]
        %v209 = vld [vmem:[%s144 + $0x140] sm:$0xff]
        %v210 = vld [vmem:[%s144 + $0x148] sm:$0xff]
        %v211 = vld [vmem:[%s144 + $0x150] sm:$0xff]
        %v212 = vld [vmem:[%s144 + $0x158] sm:$0xff]
        %v213 = vld [vmem:[%s144 + $0x160] sm:$0xff]
        %v214 = vld [vmem:[%s144 + $0x168] sm:$0xff]
        %v215 = vld [vmem:[%s144 + $0x170] sm:$0xff]
        %v216 = vld [vmem:[%s144 + $0x178] sm:$0xff]
        %v217 = vld [vmem:[%s144 + $0x180] sm:$0xff]
        %v218 = vld [vmem:[%s144 + $0x188] sm:$0xff]
        %v219 = vld [vmem:[%s144 + $0x190] sm:$0xff]
        %v220 = vld [vmem:[%s144 + $0x198] sm:$0xff]
        %v221 = vld [vmem:[%s144 + $0x1a0] sm:$0xff]
        %v222 = vld [vmem:[%s144 + $0x1a8] sm:$0xff]
        %v223 = vld [vmem:[%s144 + $0x1b0] sm:$0xff]
        %v224 = vld [vmem:[%s144 + $0x1b8] sm:$0xff]
        %v225 = vld [vmem:[%s144 + $0x1c0] sm:$0xff]
        %v226 = vld [vmem:[%s144 + $0x1c8] sm:$0xff]
        %v227 = vld [vmem:[%s144 + $0x1d0] sm:$0xff]
        %v228 = vld [vmem:[%s144 + $0x1d8] sm:$0xff]
        %v229 = vld [vmem:[%s144 + $0x1e0] sm:$0xff]
        %v230 = vld [vmem:[%s144 + $0x1e8] sm:$0xff]
        %v231 = vld [vmem:[%s144 + $0x1f0] sm:$0xff]
        %v232 = vld [vmem:[%s144 + $0x1f8] sm:$0xff]
        %v233 = vld [vmem:[%s144 + $0x200] sm:$0xff]
        %v234 = vld [vmem:[%s144 + $0x208] sm:$0xff]
        %v235 = vld [vmem:[%s144 + $0x210] sm:$0xff]
        %v236 = vld [vmem:[%s144 + $0x218] sm:$0xff]
        %v237 = vld [vmem:[%s144 + $0x220] sm:$0xff]
        %v238 = vld [vmem:[%s144 + $0x228] sm:$0xff]
        %v239 = vld [vmem:[%s144 + $0x230] sm:$0xff]
        %v240 = vld [vmem:[%s144 + $0x238] sm:$0xff]
        %v241 = vld [vmem:[%s144 + $0x240] sm:$0xff]
        %v242 = vld [vmem:[%s144 + $0x248] sm:$0xff]
        %v243 = vld [vmem:[%s144 + $0x250] sm:$0xff]
        %v244 = vld [vmem:[%s144 + $0x258] sm:$0xff]
        %v245 = vld [vmem:[%s144 + $0x260] sm:$0xff]
        %v246 = vld [vmem:[%s144 + $0x268] sm:$0xff]
        %v247 = vld [vmem:[%s144 + $0x270] sm:$0xff]
        %v248 = vld [vmem:[%s144 + $0x278] sm:$0xff]
        %v249 = vld [vmem:[%s144 + $0x280] sm:$0xff]
        %v250 = vld [vmem:[%s144 + $0x288] sm:$0xff]
        %v251 = vld [vmem:[%s144 + $0x290] sm:$0xff]
        %v252 = vld [vmem:[%s144 + $0x298] sm:$0xff]
        %v253 = vld [vmem:[%s144 + $0x2a0] sm:$0xff]
        %v254 = vld [vmem:[%s144 + $0x2a8] sm:$0xff]
        %v255 = vld [vmem:[%s144 + $0x2b0] sm:$0xff]
        %v256 = vld [vmem:[%s144 + $0x2b8] sm:$0xff]
        %v257 = vld [vmem:[%s144 + $0x2c0] sm:$0xff]
        %v258 = vld [vmem:[%s144 + $0x2c8] sm:$0xff]
        %v259 = vld [vmem:[%s144 + $0x2d0] sm:$0xff]
        %v260 = vld [vmem:[%s144 + $0x2d8] sm:$0xff]
        %v261 = vld [vmem:[%s144 + $0x2e0] sm:$0xff]
        %v262 = vld [vmem:[%s144 + $0x2e8] sm:$0xff]
        %v263 = vld [vmem:[%s144 + $0x2f0] sm:$0xff]
        %v264 = vld [vmem:[%s144 + $0x2f8] sm:$0xff]
        %v265 = vld [vmem:[%s144 + $0x300] sm:$0xff]
        %v266 = vld [vmem:[%s144 + $0x308] sm:$0xff]
        %v267 = vld [vmem:[%s144 + $0x310] sm:$0xff]
        %v268 = vld [vmem:[%s144 + $0x318] sm:$0xff]
        %v269 = vld [vmem:[%s144 + $0x320] sm:$0xff]
        %v270 = vld [vmem:[%s144 + $0x328] sm:$0xff]
        %v271 = vld [vmem:[%s144 + $0x330] sm:$0xff]
        %v272 = vld [vmem:[%s144 + $0x338] sm:$0xff]
        %v273 = vld [vmem:[%s144 + $0x340] sm:$0xff]
        %v274 = vld [vmem:[%s144 + $0x348] sm:$0xff]
        %v275 = vld [vmem:[%s144 + $0x350] sm:$0xff]
        %v276 = vld [vmem:[%s144 + $0x358] sm:$0xff]
        %v277 = vld [vmem:[%s144 + $0x360] sm:$0xff]
        %v278 = vld [vmem:[%s144 + $0x368] sm:$0xff]
        %v279 = vld [vmem:[%s144 + $0x370] sm:$0xff]
        %v280 = vld [vmem:[%s144 + $0x378] sm:$0xff]
        %v281 = vld [vmem:[%s144 + $0x380] sm:$0xff]
        %v282 = vld [vmem:[%s144 + $0x388] sm:$0xff]
        %v283 = vld [vmem:[%s144 + $0x390] sm:$0xff]
        %v284 = vld [vmem:[%s144 + $0x398] sm:$0xff]
        %v285 = vld [vmem:[%s144 + $0x3a0] sm:$0xff]
        %v286 = vld [vmem:[%s144 + $0x3a8] sm:$0xff]
        %v287 = vld [vmem:[%s144 + $0x3b0] sm:$0xff]
        %v288 = vld [vmem:[%s144 + $0x3b8] sm:$0xff]
        %v289 = vld [vmem:[%s144 + $0x3c0] sm:$0xff]
        %v290 = vld [vmem:[%s144 + $0x3c8] sm:$0xff]
        %v291 = vld [vmem:[%s144 + $0x3d0] sm:$0xff]
        %v292 = vld [vmem:[%s144 + $0x3d8] sm:$0xff]
        %v293 = vld [vmem:[%s144 + $0x3e0] sm:$0xff]
        %v294 = vld [vmem:[%s144 + $0x3e8] sm:$0xff]
        %v295 = vld [vmem:[%s144 + $0x3f0] sm:$0xff]
        %v296 = vld [vmem:[%s144 + $0x3f8] sm:$0xff]
        %v297 = vld [vmem:[%s144 + $0x400] sm:$0xff]
        %v298 = vld [vmem:[%s144 + $0x408] sm:$0xff]
        %v299 = vld [vmem:[%s144 + $0x410] sm:$0xff]
        %v300 = vld [vmem:[%s144 + $0x418] sm:$0xff]
        %v301 = vld [vmem:[%s144 + $0x420] sm:$0xff]
        %v302 = vld [vmem:[%s144 + $0x428] sm:$0xff]
        %v303 = vld [vmem:[%s144 + $0x430] sm:$0xff]
        %v304 = vld [vmem:[%s144 + $0x438] sm:$0xff]
        %v305 = vld [vmem:[%s144 + $0x440] sm:$0xff]
        %v306 = vld [vmem:[%s144 + $0x448] sm:$0xff]
        %v307 = vld [vmem:[%s144 + $0x450] sm:$0xff]
        %v308 = vld [vmem:[%s144 + $0x458] sm:$0xff]
        %v309 = vld [vmem:[%s144 + $0x460] sm:$0xff]
        %v310 = vld [vmem:[%s144 + $0x468] sm:$0xff]
        %v311 = vld [vmem:[%s144 + $0x470] sm:$0xff]
        %v312 = vld [vmem:[%s144 + $0x478] sm:$0xff]
        %v313 = vld [vmem:[%s144 + $0x480] sm:$0xff]
        %v314 = vld [vmem:[%s144 + $0x488] sm:$0xff]
        %v315 = vld [vmem:[%s144 + $0x490] sm:$0xff]
        %v316 = vld [vmem:[%s144 + $0x498] sm:$0xff]
        %v317 = vld [vmem:[%s144 + $0x4a0] sm:$0xff]
        %v318 = vld [vmem:[%s144 + $0x4a8] sm:$0xff]
        %v319 = vld [vmem:[%s144 + $0x4b0] sm:$0xff]
        %v320 = vld [vmem:[%s144 + $0x4b8] sm:$0xff]
        %v321 = vld [vmem:[%s144 + $0x4c0] sm:$0xff]
        %v322 = vld [vmem:[%s144 + $0x4c8] sm:$0xff]
        %v323 = vld [vmem:[%s144 + $0x4d0] sm:$0xff]
        %v324 = vld [vmem:[%s144 + $0x4d8] sm:$0xff]
        %v325 = vld [vmem:[%s144 + $0x4e0] sm:$0xff]
        %v326 = vld [vmem:[%s144 + $0x4e8] sm:$0xff]
        %v327 = vld [vmem:[%s144 + $0x4f0] sm:$0xff]
        %v328 = vld [vmem:[%s144 + $0x4f8] sm:$0xff]
        %v329 = vld [vmem:[%s144 + $0x500] sm:$0xff]
        %v330 = vld [vmem:[%s144 + $0x508] sm:$0xff]
        %v331 = vld [vmem:[%s144 + $0x510] sm:$0xff]
        %v332 = vld [vmem:[%s144 + $0x518] sm:$0xff]
        %v333 = vld [vmem:[%s144 + $0x520] sm:$0xff]
        %v334 = vld [vmem:[%s144 + $0x528] sm:$0xff]
        %v335 = vld [vmem:[%s144 + $0x530] sm:$0xff]
        %v336 = vld [vmem:[%s144 + $0x538] sm:$0xff]
        %v337 = vld [vmem:[%s144 + $0x540] sm:$0xff]
        %v338 = vld [vmem:[%s144 + $0x548] sm:$0xff]
        %v339 = vld [vmem:[%s144 + $0x550] sm:$0xff]
        %v340 = vld [vmem:[%s144 + $0x558] sm:$0xff]
        %v341 = vld [vmem:[%s144 + $0x560] sm:$0xff]
        %v342 = vld [vmem:[%s144 + $0x568] sm:$0xff]
        %v343 = vld [vmem:[%s144 + $0x570] sm:$0xff]
        %v344 = vld [vmem:[%s144 + $0x578] sm:$0xff]
        %v345 = vld [vmem:[%s144 + $0x580] sm:$0xff]
        %v346 = vld [vmem:[%s144 + $0x588] sm:$0xff]
        %v347 = vld [vmem:[%s144 + $0x590] sm:$0xff]
        %v348 = vld [vmem:[%s144 + $0x598] sm:$0xff]
        %v349 = vld [vmem:[%s144 + $0x5a0] sm:$0xff]
        %v350 = vld [vmem:[%s144 + $0x5a8] sm:$0xff]
        %v351 = vld [vmem:[%s144 + $0x5b0] sm:$0xff]
        %v352 = vld [vmem:[%s144 + $0x5b8] sm:$0xff]
        %v353 = vld [vmem:[%s144 + $0x5c0] sm:$0xff]
        %v354 = vld [vmem:[%s144 + $0x5c8] sm:$0xff]
        %v355 = vld [vmem:[%s144 + $0x5d0] sm:$0xff]
        %v356 = vld [vmem:[%s144 + $0x5d8] sm:$0xff]
        %v357 = vld [vmem:[%s144 + $0x5e0] sm:$0xff]
        %v358 = vld [vmem:[%s144 + $0x5e8] sm:$0xff]
        %v359 = vld [vmem:[%s144 + $0x5f0] sm:$0xff]
        %v360 = vld [vmem:[%s144 + $0x5f8] sm:$0xff]
        %v361 = vld [vmem:[%s144 + $0x600] sm:$0xff]
        %v362 = vld [vmem:[%s144 + $0x608] sm:$0xff]
        %v363 = vld [vmem:[%s144 + $0x610] sm:$0xff]
        %v364 = vld [vmem:[%s144 + $0x618] sm:$0xff]
        %v365 = vld [vmem:[%s144 + $0x620] sm:$0xff]
        %v366 = vld [vmem:[%s144 + $0x628] sm:$0xff]
        %v367 = vld [vmem:[%s144 + $0x630] sm:$0xff]
        %v368 = vld [vmem:[%s144 + $0x638] sm:$0xff]
        %v369 = vld [vmem:[%s144 + $0x640] sm:$0xff]
        %v370 = vld [vmem:[%s144 + $0x648] sm:$0xff]
        %v371 = vld [vmem:[%s144 + $0x650] sm:$0xff]
        %v372 = vld [vmem:[%s144 + $0x658] sm:$0xff]
        %v373 = vld [vmem:[%s144 + $0x660] sm:$0xff]
        %v374 = vld [vmem:[%s144 + $0x668] sm:$0xff]
        %v375 = vld [vmem:[%s144 + $0x670] sm:$0xff]
        %v376 = vld [vmem:[%s144 + $0x678] sm:$0xff]
        %v377 = vld [vmem:[%s144 + $0x680] sm:$0xff]
        %v378 = vld [vmem:[%s144 + $0x688] sm:$0xff]
        %v379 = vld [vmem:[%s144 + $0x690] sm:$0xff]
        %v380 = vld [vmem:[%s144 + $0x698] sm:$0xff]
        %v381 = vld [vmem:[%s144 + $0x6a0] sm:$0xff]
        %v382 = vld [vmem:[%s144 + $0x6a8] sm:$0xff]
        %v383 = vld [vmem:[%s144 + $0x6b0] sm:$0xff]
        %v384 = vld [vmem:[%s144 + $0x6b8] sm:$0xff]
        %v385 = vld [vmem:[%s144 + $0x6c0] sm:$0xff]
        %v386 = vld [vmem:[%s144 + $0x6c8] sm:$0xff]
        %v387 = vld [vmem:[%s144 + $0x6d0] sm:$0xff]
        %v388 = vld [vmem:[%s144 + $0x6d8] sm:$0xff]
        %v389 = vld [vmem:[%s144 + $0x6e0] sm:$0xff]
        %v390 = vld [vmem:[%s144 + $0x6e8] sm:$0xff]
        %v391 = vld [vmem:[%s144 + $0x6f0] sm:$0xff]
        %v392 = vld [vmem:[%s144 + $0x6f8] sm:$0xff]
        %v393 = vld [vmem:[%s144 + $0x700] sm:$0xff]
        %v394 = vld [vmem:[%s144 + $0x708] sm:$0xff]
        %v395 = vld [vmem:[%s144 + $0x710] sm:$0xff]
        %v396 = vld [vmem:[%s144 + $0x718] sm:$0xff]
        %v397 = vld [vmem:[%s144 + $0x720] sm:$0xff]
        %v398 = vld [vmem:[%s144 + $0x728] sm:$0xff]
        %v399 = vld [vmem:[%s144 + $0x730] sm:$0xff]
        %v400 = vld [vmem:[%s144 + $0x738] sm:$0xff]
        %v401 = vld [vmem:[%s144 + $0x740] sm:$0xff]
        %v402 = vld [vmem:[%s144 + $0x748] sm:$0xff]
        %v403 = vld [vmem:[%s144 + $0x750] sm:$0xff]
        %v404 = vld [vmem:[%s144 + $0x758] sm:$0xff]
        %v405 = vld [vmem:[%s144 + $0x760] sm:$0xff]
        %v406 = vld [vmem:[%s144 + $0x768] sm:$0xff]
        %v407 = vld [vmem:[%s144 + $0x770] sm:$0xff]
        %v408 = vld [vmem:[%s144 + $0x778] sm:$0xff]
        %v409 = vld [vmem:[%s144 + $0x780] sm:$0xff]
        %v410 = vld [vmem:[%s144 + $0x788] sm:$0xff]
        %v411 = vld [vmem:[%s144 + $0x790] sm:$0xff]
        %v412 = vld [vmem:[%s144 + $0x798] sm:$0xff]
        %v413 = vld [vmem:[%s144 + $0x7a0] sm:$0xff]
        %v414 = vld [vmem:[%s144 + $0x7a8] sm:$0xff]
        %v415 = vld [vmem:[%s144 + $0x7b0] sm:$0xff]
        %v416 = vld [vmem:[%s144 + $0x7b8] sm:$0xff]
        %v417 = vld [vmem:[%s144 + $0x7c0] sm:$0xff]
        %v418 = vld [vmem:[%s144 + $0x7c8] sm:$0xff]
        %v419 = vld [vmem:[%s144 + $0x7d0] sm:$0xff]
        %v420 = vld [vmem:[%s144 + $0x7d8] sm:$0xff]
        %v421 = vld [vmem:[%s144 + $0x7e0] sm:$0xff]
        %v422 = vld [vmem:[%s144 + $0x7e8] sm:$0xff]
        %v423 = vld [vmem:[%s144 + $0x7f0] sm:$0xff]
        %v424 = vld [vmem:[%s144 + $0x7f8] sm:$0xff]
        %v425 = vld [vmem:[%s144 + $0x800] sm:$0xff]
        %v426 = vld [vmem:[%s144 + $0x808] sm:$0xff]
        %v427 = vld [vmem:[%s144 + $0x810] sm:$0xff]
        %v428 = vld [vmem:[%s144 + $0x818] sm:$0xff]
        %v429 = vld [vmem:[%s144 + $0x820] sm:$0xff]
        %v430 = vld [vmem:[%s144 + $0x828] sm:$0xff]
        %v431 = vld [vmem:[%s144 + $0x830] sm:$0xff]
        %v432 = vld [vmem:[%s144 + $0x838] sm:$0xff]
        %v433 = vld [vmem:[%s144 + $0x840] sm:$0xff]
        %v434 = vld [vmem:[%s144 + $0x848] sm:$0xff]
        %v435 = vld [vmem:[%s144 + $0x850] sm:$0xff]
        %v436 = vld [vmem:[%s144 + $0x858] sm:$0xff]
        %v437 = vld [vmem:[%s144 + $0x860] sm:$0xff]
        %v438 = vld [vmem:[%s144 + $0x868] sm:$0xff]
        %v439 = vld [vmem:[%s144 + $0x870] sm:$0xff]
        %v440 = vld [vmem:[%s144 + $0x878] sm:$0xff]
        %v441 = vld [vmem:[%s144 + $0x880] sm:$0xff]
        %v442 = vld [vmem:[%s144 + $0x888] sm:$0xff]
        %v443 = vld [vmem:[%s144 + $0x890] sm:$0xff]
        %v444 = vld [vmem:[%s144 + $0x898] sm:$0xff]
        %v445 = vld [vmem:[%s144 + $0x8a0] sm:$0xff]
        %v446 = vld [vmem:[%s144 + $0x8a8] sm:$0xff]
        %v447 = vld [vmem:[%s144 + $0x8b0] sm:$0xff]
        %v448 = vld [vmem:[%s144 + $0x8b8] sm:$0xff]
        %v449 = vld [vmem:[%s144 + $0x8c0] sm:$0xff]
        %v450 = vld [vmem:[%s144 + $0x8c8] sm:$0xff]
        %v451 = vld [vmem:[%s144 + $0x8d0] sm:$0xff]
        %v452 = vld [vmem:[%s144 + $0x8d8] sm:$0xff]
        %v453 = vld [vmem:[%s144 + $0x8e0] sm:$0xff]
        %v454 = vld [vmem:[%s144 + $0x8e8] sm:$0xff]
        %v455 = vld [vmem:[%s144 + $0x8f0] sm:$0xff]
        %v456 = vld [vmem:[%s144 + $0x8f8] sm:$0xff]
        %v457 = vld [vmem:[%s144 + $0x900] sm:$0xff]
        %v458 = vld [vmem:[%s144 + $0x908] sm:$0xff]
        %v459 = vld [vmem:[%s144 + $0x910] sm:$0xff]
        %v460 = vld [vmem:[%s144 + $0x918] sm:$0xff]
        %v461 = vld [vmem:[%s144 + $0x920] sm:$0xff]
        %v462 = vld [vmem:[%s144 + $0x928] sm:$0xff]
        %v463 = vld [vmem:[%s144 + $0x930] sm:$0xff]
        %v464 = vld [vmem:[%s144 + $0x938] sm:$0xff]
        %v465 = vld [vmem:[%s144 + $0x940] sm:$0xff]
        %v466 = vld [vmem:[%s144 + $0x948] sm:$0xff]
        %v467 = vld [vmem:[%s144 + $0x950] sm:$0xff]
        %v468 = vld [vmem:[%s144 + $0x958] sm:$0xff]
        %v469 = vld [vmem:[%s144 + $0x960] sm:$0xff]
        %v470 = vld [vmem:[%s144 + $0x968] sm:$0xff]
        %v471 = vld [vmem:[%s144 + $0x970] sm:$0xff]
        %v472 = vld [vmem:[%s144 + $0x978] sm:$0xff]
        %v473 = vld [vmem:[%s144 + $0x980] sm:$0xff]
        %v474 = vld [vmem:[%s144 + $0x988] sm:$0xff]
        %v475 = vld [vmem:[%s144 + $0x990] sm:$0xff]
        %v476 = vld [vmem:[%s144 + $0x998] sm:$0xff]
        %v477 = vld [vmem:[%s144 + $0x9a0] sm:$0xff]
        %v478 = vld [vmem:[%s144 + $0x9a8] sm:$0xff]
        %v479 = vld [vmem:[%s144 + $0x9b0] sm:$0xff]
        %v480 = vld [vmem:[%s144 + $0x9b8] sm:$0xff]
        %v481 = vld [vmem:[%s144 + $0x9c0] sm:$0xff]
        %v482 = vld [vmem:[%s144 + $0x9c8] sm:$0xff]
        %v483 = vld [vmem:[%s144 + $0x9d0] sm:$0xff]
        %v484 = vld [vmem:[%s144 + $0x9d8] sm:$0xff]
        %v485 = vld [vmem:[%s144 + $0x9e0] sm:$0xff]
        %v486 = vld [vmem:[%s144 + $0x9e8] sm:$0xff]
        %v487 = vld [vmem:[%s144 + $0x9f0] sm:$0xff]
        %v488 = vld [vmem:[%s144 + $0x9f8] sm:$0xff]
        %v489 = vld [vmem:[%s144 + $0xa00] sm:$0xff]
        %v490 = vld [vmem:[%s144 + $0xa08] sm:$0xff]
        %v491 = vld [vmem:[%s144 + $0xa10] sm:$0xff]
        %v492 = vld [vmem:[%s144 + $0xa18] sm:$0xff]
        %v493 = vld [vmem:[%s144 + $0xa20] sm:$0xff]
        %v494 = vld [vmem:[%s144 + $0xa28] sm:$0xff]
        %v495 = vld [vmem:[%s144 + $0xa30] sm:$0xff]
        %v496 = vld [vmem:[%s144 + $0xa38] sm:$0xff]
        %v497 = vld [vmem:[%s144 + $0xa40] sm:$0xff]
        %v498 = vld [vmem:[%s144 + $0xa48] sm:$0xff]
        %v499 = vld [vmem:[%s144 + $0xa50] sm:$0xff]
        %v500 = vld [vmem:[%s144 + $0xa58] sm:$0xff]
        %v501 = vld [vmem:[%s144 + $0xa60] sm:$0xff]
        %v502 = vld [vmem:[%s144 + $0xa68] sm:$0xff]
        %v503 = vld [vmem:[%s144 + $0xa70] sm:$0xff]
        %v504 = vld [vmem:[%s144 + $0xa78] sm:$0xff]
        %v505 = vld [vmem:[%s144 + $0xa80] sm:$0xff]
        %v506 = vld [vmem:[%s144 + $0xa88] sm:$0xff]
        %v507 = vld [vmem:[%s144 + $0xa90] sm:$0xff]
        %v508 = vld [vmem:[%s144 + $0xa98] sm:$0xff]
        %v509 = vld [vmem:[%s144 + $0xaa0] sm:$0xff]
        %v510 = vld [vmem:[%s144 + $0xaa8] sm:$0xff]
        %v511 = vld [vmem:[%s144 + $0xab0] sm:$0xff]
        %v512 = vld [vmem:[%s144 + $0xab8] sm:$0xff]
        %v513 = vld [vmem:[%s144 + $0xac0] sm:$0xff]
        %v514 = vld [vmem:[%s144 + $0xac8] sm:$0xff]
        %v515 = vld [vmem:[%s144 + $0xad0] sm:$0xff]
        %v516 = vld [vmem:[%s144 + $0xad8] sm:$0xff]
        %v517 = vld [vmem:[%s144 + $0xae0] sm:$0xff]
        %v518 = vld [vmem:[%s144 + $0xae8] sm:$0xff]
        %v519 = vld [vmem:[%s144 + $0xaf0] sm:$0xff]
        %v520 = vld [vmem:[%s144 + $0xaf8] sm:$0xff]
        %v521 = vld [vmem:[%s144 + $0xb00] sm:$0xff]
        %v522 = vld [vmem:[%s144 + $0xb08] sm:$0xff]
        %v523 = vld [vmem:[%s144 + $0xb10] sm:$0xff]
        %v524 = vld [vmem:[%s144 + $0xb18] sm:$0xff]
        %v525 = vld [vmem:[%s144 + $0xb20] sm:$0xff]
        %v526 = vld [vmem:[%s144 + $0xb28] sm:$0xff]
        %v527 = vld [vmem:[%s144 + $0xb30] sm:$0xff]
        %v528 = vld [vmem:[%s144 + $0xb38] sm:$0xff]
        %v529 = vld [vmem:[%s144 + $0xb40] sm:$0xff]
        %v530 = vld [vmem:[%s144 + $0xb48] sm:$0xff]
        %v531 = vld [vmem:[%s144 + $0xb50] sm:$0xff]
        %v532 = vld [vmem:[%s144 + $0xb58] sm:$0xff]
        %v533 = vld [vmem:[%s144 + $0xb60] sm:$0xff]
        %v534 = vld [vmem:[%s144 + $0xb68] sm:$0xff]
        %v535 = vld [vmem:[%s144 + $0xb70] sm:$0xff]
        %v536 = vld [vmem:[%s144 + $0xb78] sm:$0xff]
        %v537 = vld [vmem:[%s144 + $0xb80] sm:$0xff]
        %v538 = vld [vmem:[%s144 + $0xb88] sm:$0xff]
        %v539 = vld [vmem:[%s144 + $0xb90] sm:$0xff]
        %v540 = vld [vmem:[%s144 + $0xb98] sm:$0xff]
        %v541 = vld [vmem:[%s144 + $0xba0] sm:$0xff]
        %v542 = vld [vmem:[%s144 + $0xba8] sm:$0xff]
        %v543 = vld [vmem:[%s144 + $0xbb0] sm:$0xff]
        %v544 = vld [vmem:[%s144 + $0xbb8] sm:$0xff]
        %v545 = vld [vmem:[%s144 + $0xbc0] sm:$0xff]
        %v546 = vld [vmem:[%s144 + $0xbc8] sm:$0xff]
        %v547 = vld [vmem:[%s144 + $0xbd0] sm:$0xff]
        %v548 = vld [vmem:[%s144 + $0xbd8] sm:$0xff]
        %v549 = vld [vmem:[%s144 + $0xbe0] sm:$0xff]
        %v550 = vld [vmem:[%s144 + $0xbe8] sm:$0xff]
        %v551 = vld [vmem:[%s144 + $0xbf0] sm:$0xff]
        %v552 = vld [vmem:[%s144 + $0xbf8] sm:$0xff]
        %v553 = vld [vmem:[%s144 + $0xc00] sm:$0xff]
        %v554 = vld [vmem:[%s144 + $0xc08] sm:$0xff]
        %v555 = vld [vmem:[%s144 + $0xc10] sm:$0xff]
        %v556 = vld [vmem:[%s144 + $0xc18] sm:$0xff]
        %v557 = vld [vmem:[%s144 + $0xc20] sm:$0xff]
        %v558 = vld [vmem:[%s144 + $0xc28] sm:$0xff]
        %v559 = vld [vmem:[%s144 + $0xc30] sm:$0xff]
        %v560 = vld [vmem:[%s144 + $0xc38] sm:$0xff]
        %v561 = vld [vmem:[%s144 + $0xc40] sm:$0xff]
        %v562 = vld [vmem:[%s144 + $0xc48] sm:$0xff]
        %v563 = vld [vmem:[%s144 + $0xc50] sm:$0xff]
        %v564 = vld [vmem:[%s144 + $0xc58] sm:$0xff]
        %v565 = vld [vmem:[%s144 + $0xc60] sm:$0xff]
        %v566 = vld [vmem:[%s144 + $0xc68] sm:$0xff]
        %v567 = vld [vmem:[%s144 + $0xc70] sm:$0xff]
        %v568 = vld [vmem:[%s144 + $0xc78] sm:$0xff]
        %v569 = vld [vmem:[%s144 + $0xc80] sm:$0xff]
        %v570 = vld [vmem:[%s144 + $0xc88] sm:$0xff]
        %v571 = vld [vmem:[%s144 + $0xc90] sm:$0xff]
        %v572 = vld [vmem:[%s144 + $0xc98] sm:$0xff]
        %v573 = vld [vmem:[%s144 + $0xca0] sm:$0xff]
        %v574 = vld [vmem:[%s144 + $0xca8] sm:$0xff]
        %v575 = vld [vmem:[%s144 + $0xcb0] sm:$0xff]
        %v576 = vld [vmem:[%s144 + $0xcb8] sm:$0xff]
        %v577 = vld [vmem:[%s144 + $0xcc0] sm:$0xff]
        %v578 = vld [vmem:[%s144 + $0xcc8] sm:$0xff]
        %v579 = vld [vmem:[%s144 + $0xcd0] sm:$0xff]
        %v580 = vld [vmem:[%s144 + $0xcd8] sm:$0xff]
        %v581 = vld [vmem:[%s144 + $0xce0] sm:$0xff]
        %v582 = vld [vmem:[%s144 + $0xce8] sm:$0xff]
        %v583 = vld [vmem:[%s144 + $0xcf0] sm:$0xff]
        %v584 = vld [vmem:[%s144 + $0xcf8] sm:$0xff]
        %v585 = vld [vmem:[%s144 + $0xd00] sm:$0xff]
        %v586 = vld [vmem:[%s144 + $0xd08] sm:$0xff]
        %v587 = vld [vmem:[%s144 + $0xd10] sm:$0xff]
        %v588 = vld [vmem:[%s144 + $0xd18] sm:$0xff]
        %v589 = vld [vmem:[%s144 + $0xd20] sm:$0xff]
        %v590 = vld [vmem:[%s144 + $0xd28] sm:$0xff]
        %v591 = vld [vmem:[%s144 + $0xd30] sm:$0xff]
        %v592 = vld [vmem:[%s144 + $0xd38] sm:$0xff]
        %v593 = vld [vmem:[%s144 + $0xd40] sm:$0xff]
        %v594 = vld [vmem:[%s144 + $0xd48] sm:$0xff]
        %v595 = vld [vmem:[%s144 + $0xd50] sm:$0xff]
        %v596 = vld [vmem:[%s144 + $0xd58] sm:$0xff]
        %v597 = vld [vmem:[%s144 + $0xd60] sm:$0xff]
        %v598 = vld [vmem:[%s144 + $0xd68] sm:$0xff]
        %v599 = vld [vmem:[%s144 + $0xd70] sm:$0xff]
        %v600 = vld [vmem:[%s144 + $0xd78] sm:$0xff]
        %v601 = vld [vmem:[%s144 + $0xd80] sm:$0xff]
        %v602 = vld [vmem:[%s144 + $0xd88] sm:$0xff]
        %v603 = vld [vmem:[%s144 + $0xd90] sm:$0xff]
        %v604 = vld [vmem:[%s144 + $0xd98] sm:$0xff]
        %v605 = vld [vmem:[%s144 + $0xda0] sm:$0xff]
        %v606 = vld [vmem:[%s144 + $0xda8] sm:$0xff]
        %v607 = vld [vmem:[%s144 + $0xdb0] sm:$0xff]
        %v608 = vld [vmem:[%s144 + $0xdb8] sm:$0xff]
        %v609 = vld [vmem:[%s144 + $0xdc0] sm:$0xff]
        %v610 = vld [vmem:[%s144 + $0xdc8] sm:$0xff]
        %v611 = vld [vmem:[%s144 + $0xdd0] sm:$0xff]
        %v612 = vld [vmem:[%s144 + $0xdd8] sm:$0xff]
        %v613 = vld [vmem:[%s144 + $0xde0] sm:$0xff]
        %v614 = vld [vmem:[%s144 + $0xde8] sm:$0xff]
        %v615 = vld [vmem:[%s144 + $0xdf0] sm:$0xff]
        %v616 = vld [vmem:[%s144 + $0xdf8] sm:$0xff]
        %v617 = vld [vmem:[%s144 + $0xe00] sm:$0xff]
        %v618 = vld [vmem:[%s144 + $0xe08] sm:$0xff]
        %v619 = vld [vmem:[%s144 + $0xe10] sm:$0xff]
        %v620 = vld [vmem:[%s144 + $0xe18] sm:$0xff]
        %v621 = vld [vmem:[%s144 + $0xe20] sm:$0xff]
        %v622 = vld [vmem:[%s144 + $0xe28] sm:$0xff]
        %v623 = vld [vmem:[%s144 + $0xe30] sm:$0xff]
        %v624 = vld [vmem:[%s144 + $0xe38] sm:$0xff]
        %v625 = vld [vmem:[%s144 + $0xe40] sm:$0xff]
        %v626 = vld [vmem:[%s144 + $0xe48] sm:$0xff]
        %v627 = vld [vmem:[%s144 + $0xe50] sm:$0xff]
        %v628 = vld [vmem:[%s144 + $0xe58] sm:$0xff]
        %v629 = vld [vmem:[%s144 + $0xe60] sm:$0xff]
        %v630 = vld [vmem:[%s144 + $0xe68] sm:$0xff]
        %v631 = vld [vmem:[%s144 + $0xe70] sm:$0xff]
        %v632 = vld [vmem:[%s144 + $0xe78] sm:$0xff]
        %v633 = vld [vmem:[%s144 + $0xe80] sm:$0xff]
        %v634 = vld [vmem:[%s144 + $0xe88] sm:$0xff]
        %v635 = vld [vmem:[%s144 + $0xe90] sm:$0xff]
        %v636 = vld [vmem:[%s144 + $0xe98] sm:$0xff]
        %v637 = vld [vmem:[%s144 + $0xea0] sm:$0xff]
        %v638 = vld [vmem:[%s144 + $0xea8] sm:$0xff]
        %v639 = vld [vmem:[%s144 + $0xeb0] sm:$0xff]
        %v640 = vld [vmem:[%s144 + $0xeb8] sm:$0xff]
        %v641 = vld [vmem:[%s144 + $0xec0] sm:$0xff]
        %v642 = vld [vmem:[%s144 + $0xec8] sm:$0xff]
        %v643 = vld [vmem:[%s144 + $0xed0] sm:$0xff]
        %v644 = vld [vmem:[%s144 + $0xed8] sm:$0xff]
        %v645 = vld [vmem:[%s144 + $0xee0] sm:$0xff]
        %v646 = vld [vmem:[%s144 + $0xee8] sm:$0xff]
        %v647 = vld [vmem:[%s144 + $0xef0] sm:$0xff]
        %v648 = vld [vmem:[%s144 + $0xef8] sm:$0xff]
        %v649 = vld [vmem:[%s144 + $0xf00] sm:$0xff]
        %v650 = vld [vmem:[%s144 + $0xf08] sm:$0xff]
        %v651 = vld [vmem:[%s144 + $0xf10] sm:$0xff]
        %v652 = vld [vmem:[%s144 + $0xf18] sm:$0xff]
        %v653 = vld [vmem:[%s144 + $0xf20] sm:$0xff]
        %v654 = vld [vmem:[%s144 + $0xf28] sm:$0xff]
        %v655 = vld [vmem:[%s144 + $0xf30] sm:$0xff]
        %v656 = vld [vmem:[%s144 + $0xf38] sm:$0xff]
        %v657 = vld [vmem:[%s144 + $0xf40] sm:$0xff]
        %v658 = vld [vmem:[%s144 + $0xf48] sm:$0xff]
        %v659 = vld [vmem:[%s144 + $0xf50] sm:$0xff]
        %v660 = vld [vmem:[%s144 + $0xf58] sm:$0xff]
        %v661 = vld [vmem:[%s144 + $0xf60] sm:$0xff]
        %v662 = vld [vmem:[%s144 + $0xf68] sm:$0xff]
        %v663 = vld [vmem:[%s144 + $0xf70] sm:$0xff]
        %v664 = vld [vmem:[%s144 + $0xf78] sm:$0xff]
        %v665 = vld [vmem:[%s144 + $0xf80] sm:$0xff]
        %v666 = vld [vmem:[%s144 + $0xf88] sm:$0xff]
        %v667 = vld [vmem:[%s144 + $0xf90] sm:$0xff]
        %v668 = vld [vmem:[%s144 + $0xf98] sm:$0xff]
        %v669 = vld [vmem:[%s144 + $0xfa0] sm:$0xff]
        %v670 = vld [vmem:[%s144 + $0xfa8] sm:$0xff]
        %v671 = vld [vmem:[%s144 + $0xfb0] sm:$0xff]
        %v672 = vld [vmem:[%s144 + $0xfb8] sm:$0xff]
        %v673 = vld [vmem:[%s144 + $0xfc0] sm:$0xff]
        %v674 = vld [vmem:[%s144 + $0xfc8] sm:$0xff]
        %v675 = vld [vmem:[%s144 + $0xfd0] sm:$0xff]
        %v676 = vld [vmem:[%s144 + $0xfd8] sm:$0xff]
        %v677 = vld [vmem:[%s144 + $0xfe0] sm:$0xff]
        %v678 = vld [vmem:[%s144 + $0xfe8] sm:$0xff]
        %v679 = vld [vmem:[%s144 + $0xff0] sm:$0xff]
        %v680 = vld [vmem:[%s144 + $0xff8] sm:$0xff]
        %v681 = vstv %s168
        %v682 = vmul.f32 %v681, %v169
        %v683 = vmul.f32 %v681, %v170
        %v684 = vmul.f32 %v681, %v171
        %v685 = vmul.f32 %v681, %v172
        %v686 = vmul.f32 %v681, %v173
        %v687 = vmul.f32 %v681, %v174
        %v688 = vmul.f32 %v681, %v175
        %v689 = vmul.f32 %v681, %v176
        %v690 = vmul.f32 %v681, %v177
        %v691 = vmul.f32 %v681, %v178
        %v692 = vmul.f32 %v681, %v179
        %v693 = vmul.f32 %v681, %v180
        %v694 = vmul.f32 %v681, %v181
        %v695 = vmul.f32 %v681, %v182
        %v696 = vmul.f32 %v681, %v183
        %v697 = vmul.f32 %v681, %v184
        %v698 = vmul.f32 %v681, %v185
        %v699 = vmul.f32 %v681, %v186
        %v700 = vmul.f32 %v681, %v187
        %v701 = vmul.f32 %v681, %v188
        %v702 = vmul.f32 %v681, %v189
        %v703 = vmul.f32 %v681, %v190
        %v704 = vmul.f32 %v681, %v191
        %v705 = vmul.f32 %v681, %v192
        %v706 = vmul.f32 %v681, %v193
        %v707 = vmul.f32 %v681, %v194
        %v708 = vmul.f32 %v681, %v195
        %v709 = vmul.f32 %v681, %v196
        %v710 = vmul.f32 %v681, %v197
        %v711 = vmul.f32 %v681, %v198
        %v712 = vmul.f32 %v681, %v199
        %v713 = vmul.f32 %v681, %v200
        %v714 = vmul.f32 %v681, %v201
        %v715 = vmul.f32 %v681, %v202
        %v716 = vmul.f32 %v681, %v203
        %v717 = vmul.f32 %v681, %v204
        %v718 = vmul.f32 %v681, %v205
        %v719 = vmul.f32 %v681, %v206
        %v720 = vmul.f32 %v681, %v207
        %v721 = vmul.f32 %v681, %v208
        %v722 = vmul.f32 %v681, %v209
        %v723 = vmul.f32 %v681, %v210
        %v724 = vmul.f32 %v681, %v211
        %v725 = vmul.f32 %v681, %v212
        %v726 = vmul.f32 %v681, %v213
        %v727 = vmul.f32 %v681, %v214
        %v728 = vmul.f32 %v681, %v215
        %v729 = vmul.f32 %v681, %v216
        %v730 = vmul.f32 %v681, %v217
        %v731 = vmul.f32 %v681, %v218
        %v732 = vmul.f32 %v681, %v219
        %v733 = vmul.f32 %v681, %v220
        %v734 = vmul.f32 %v681, %v221
        %v735 = vmul.f32 %v681, %v222
        %v736 = vmul.f32 %v681, %v223
        %v737 = vmul.f32 %v681, %v224
        %v738 = vmul.f32 %v681, %v225
        %v739 = vmul.f32 %v681, %v226
        %v740 = vmul.f32 %v681, %v227
        %v741 = vmul.f32 %v681, %v228
        %v742 = vmul.f32 %v681, %v229
        %v743 = vmul.f32 %v681, %v230
        %v744 = vmul.f32 %v681, %v231
        %v745 = vmul.f32 %v681, %v232
        %v746 = vmul.f32 %v681, %v233
        %v747 = vmul.f32 %v681, %v234
        %v748 = vmul.f32 %v681, %v235
        %v749 = vmul.f32 %v681, %v236
        %v750 = vmul.f32 %v681, %v237
        %v751 = vmul.f32 %v681, %v238
        %v752 = vmul.f32 %v681, %v239
        %v753 = vmul.f32 %v681, %v240
        %v754 = vmul.f32 %v681, %v241
        %v755 = vmul.f32 %v681, %v242
        %v756 = vmul.f32 %v681, %v243
        %v757 = vmul.f32 %v681, %v244
        %v758 = vmul.f32 %v681, %v245
        %v759 = vmul.f32 %v681, %v246
        %v760 = vmul.f32 %v681, %v247
        %v761 = vmul.f32 %v681, %v248
        %v762 = vmul.f32 %v681, %v249
        %v763 = vmul.f32 %v681, %v250
        %v764 = vmul.f32 %v681, %v251
        %v765 = vmul.f32 %v681, %v252
        %v766 = vmul.f32 %v681, %v253
        %v767 = vmul.f32 %v681, %v254
        %v768 = vmul.f32 %v681, %v255
        %v769 = vmul.f32 %v681, %v256
        %v770 = vmul.f32 %v681, %v257
        %v771 = vmul.f32 %v681, %v258
        %v772 = vmul.f32 %v681, %v259
        %v773 = vmul.f32 %v681, %v260
        %v774 = vmul.f32 %v681, %v261
        %v775 = vmul.f32 %v681, %v262
        %v776 = vmul.f32 %v681, %v263
        %v777 = vmul.f32 %v681, %v264
        %v778 = vmul.f32 %v681, %v265
        %v779 = vmul.f32 %v681, %v266
        %v780 = vmul.f32 %v681, %v267
        %v781 = vmul.f32 %v681, %v268
        %v782 = vmul.f32 %v681, %v269
        %v783 = vmul.f32 %v681, %v270
        %v784 = vmul.f32 %v681, %v271
        %v785 = vmul.f32 %v681, %v272
        %v786 = vmul.f32 %v681, %v273
        %v787 = vmul.f32 %v681, %v274
        %v788 = vmul.f32 %v681, %v275
        %v789 = vmul.f32 %v681, %v276
        %v790 = vmul.f32 %v681, %v277
        %v791 = vmul.f32 %v681, %v278
        %v792 = vmul.f32 %v681, %v279
        %v793 = vmul.f32 %v681, %v280
        %v794 = vmul.f32 %v681, %v281
        %v795 = vmul.f32 %v681, %v282
        %v796 = vmul.f32 %v681, %v283
        %v797 = vmul.f32 %v681, %v284
        %v798 = vmul.f32 %v681, %v285
        %v799 = vmul.f32 %v681, %v286
        %v800 = vmul.f32 %v681, %v287
        %v801 = vmul.f32 %v681, %v288
        %v802 = vmul.f32 %v681, %v289
        %v803 = vmul.f32 %v681, %v290
        %v804 = vmul.f32 %v681, %v291
        %v805 = vmul.f32 %v681, %v292
        %v806 = vmul.f32 %v681, %v293
        %v807 = vmul.f32 %v681, %v294
        %v808 = vmul.f32 %v681, %v295
        %v809 = vmul.f32 %v681, %v296
        %v810 = vmul.f32 %v681, %v297
        %v811 = vmul.f32 %v681, %v298
        %v812 = vmul.f32 %v681, %v299
        %v813 = vmul.f32 %v681, %v300
        %v814 = vmul.f32 %v681, %v301
        %v815 = vmul.f32 %v681, %v302
        %v816 = vmul.f32 %v681, %v303
        %v817 = vmul.f32 %v681, %v304
        %v818 = vmul.f32 %v681, %v305
        %v819 = vmul.f32 %v681, %v306
        %v820 = vmul.f32 %v681, %v307
        %v821 = vmul.f32 %v681, %v308
        %v822 = vmul.f32 %v681, %v309
        %v823 = vmul.f32 %v681, %v310
        %v824 = vmul.f32 %v681, %v311
        %v825 = vmul.f32 %v681, %v312
        %v826 = vmul.f32 %v681, %v313
        %v827 = vmul.f32 %v681, %v314
        %v828 = vmul.f32 %v681, %v315
        %v829 = vmul.f32 %v681, %v316
        %v830 = vmul.f32 %v681, %v317
        %v831 = vmul.f32 %v681, %v318
        %v832 = vmul.f32 %v681, %v319
        %v833 = vmul.f32 %v681, %v320
        %v834 = vmul.f32 %v681, %v321
        %v835 = vmul.f32 %v681, %v322
        %v836 = vmul.f32 %v681, %v323
        %v837 = vmul.f32 %v681, %v324
        %v838 = vmul.f32 %v681, %v325
        %v839 = vmul.f32 %v681, %v326
        %v840 = vmul.f32 %v681, %v327
        %v841 = vmul.f32 %v681, %v328
        %v842 = vmul.f32 %v681, %v329
        %v843 = vmul.f32 %v681, %v330
        %v844 = vmul.f32 %v681, %v331
        %v845 = vmul.f32 %v681, %v332
        %v846 = vmul.f32 %v681, %v333
        %v847 = vmul.f32 %v681, %v334
        %v848 = vmul.f32 %v681, %v335
        %v849 = vmul.f32 %v681, %v336
        %v850 = vmul.f32 %v681, %v337
        %v851 = vmul.f32 %v681, %v338
        %v852 = vmul.f32 %v681, %v339
        %v853 = vmul.f32 %v681, %v340
        %v854 = vmul.f32 %v681, %v341
        %v855 = vmul.f32 %v681, %v342
        %v856 = vmul.f32 %v681, %v343
        %v857 = vmul.f32 %v681, %v344
        %v858 = vmul.f32 %v681, %v345
        %v859 = vmul.f32 %v681, %v346
        %v860 = vmul.f32 %v681, %v347
        %v861 = vmul.f32 %v681, %v348
        %v862 = vmul.f32 %v681, %v349
        %v863 = vmul.f32 %v681, %v350
        %v864 = vmul.f32 %v681, %v351
        %v865 = vmul.f32 %v681, %v352
        %v866 = vmul.f32 %v681, %v353
        %v867 = vmul.f32 %v681, %v354
        %v868 = vmul.f32 %v681, %v355
        %v869 = vmul.f32 %v681, %v356
        %v870 = vmul.f32 %v681, %v357
        %v871 = vmul.f32 %v681, %v358
        %v872 = vmul.f32 %v681, %v359
        %v873 = vmul.f32 %v681, %v360
        %v874 = vmul.f32 %v681, %v361
        %v875 = vmul.f32 %v681, %v362
        %v876 = vmul.f32 %v681, %v363
        %v877 = vmul.f32 %v681, %v364
        %v878 = vmul.f32 %v681, %v365
        %v879 = vmul.f32 %v681, %v366
        %v880 = vmul.f32 %v681, %v367
        %v881 = vmul.f32 %v681, %v368
        %v882 = vmul.f32 %v681, %v369
        %v883 = vmul.f32 %v681, %v370
        %v884 = vmul.f32 %v681, %v371
        %v885 = vmul.f32 %v681, %v372
        %v886 = vmul.f32 %v681, %v373
        %v887 = vmul.f32 %v681, %v374
        %v888 = vmul.f32 %v681, %v375
        %v889 = vmul.f32 %v681, %v376
        %v890 = vmul.f32 %v681, %v377
        %v891 = vmul.f32 %v681, %v378
        %v892 = vmul.f32 %v681, %v379
        %v893 = vmul.f32 %v681, %v380
        %v894 = vmul.f32 %v681, %v381
        %v895 = vmul.f32 %v681, %v382
        %v896 = vmul.f32 %v681, %v383
        %v897 = vmul.f32 %v681, %v384
        %v898 = vmul.f32 %v681, %v385
        %v899 = vmul.f32 %v681, %v386
        %v900 = vmul.f32 %v681, %v387
        %v901 = vmul.f32 %v681, %v388
        %v902 = vmul.f32 %v681, %v389
        %v903 = vmul.f32 %v681, %v390
        %v904 = vmul.f32 %v681, %v391
        %v905 = vmul.f32 %v681, %v392
        %v906 = vmul.f32 %v681, %v393
        %v907 = vmul.f32 %v681, %v394
        %v908 = vmul.f32 %v681, %v395
        %v909 = vmul.f32 %v681, %v396
        %v910 = vmul.f32 %v681, %v397
        %v911 = vmul.f32 %v681, %v398
        %v912 = vmul.f32 %v681, %v399
        %v913 = vmul.f32 %v681, %v400
        %v914 = vmul.f32 %v681, %v401
        %v915 = vmul.f32 %v681, %v402
        %v916 = vmul.f32 %v681, %v403
        %v917 = vmul.f32 %v681, %v404
        %v918 = vmul.f32 %v681, %v405
        %v919 = vmul.f32 %v681, %v406
        %v920 = vmul.f32 %v681, %v407
        %v921 = vmul.f32 %v681, %v408
        %v922 = vmul.f32 %v681, %v409
        %v923 = vmul.f32 %v681, %v410
        %v924 = vmul.f32 %v681, %v411
        %v925 = vmul.f32 %v681, %v412
        %v926 = vmul.f32 %v681, %v413
        %v927 = vmul.f32 %v681, %v414
        %v928 = vmul.f32 %v681, %v415
        %v929 = vmul.f32 %v681, %v416
        %v930 = vmul.f32 %v681, %v417
        %v931 = vmul.f32 %v681, %v418
        %v932 = vmul.f32 %v681, %v419
        %v933 = vmul.f32 %v681, %v420
        %v934 = vmul.f32 %v681, %v421
        %v935 = vmul.f32 %v681, %v422
        %v936 = vmul.f32 %v681, %v423
        %v937 = vmul.f32 %v681, %v424
        %v938 = vmul.f32 %v681, %v425
        %v939 = vmul.f32 %v681, %v426
        %v940 = vmul.f32 %v681, %v427
        %v941 = vmul.f32 %v681, %v428
        %v942 = vmul.f32 %v681, %v429
        %v943 = vmul.f32 %v681, %v430
        %v944 = vmul.f32 %v681, %v431
        %v945 = vmul.f32 %v681, %v432
        %v946 = vmul.f32 %v681, %v433
        %v947 = vmul.f32 %v681, %v434
        %v948 = vmul.f32 %v681, %v435
        %v949 = vmul.f32 %v681, %v436
        %v950 = vmul.f32 %v681, %v437
        %v951 = vmul.f32 %v681, %v438
        %v952 = vmul.f32 %v681, %v439
        %v953 = vmul.f32 %v681, %v440
        %v954 = vmul.f32 %v681, %v441
        %v955 = vmul.f32 %v681, %v442
        %v956 = vmul.f32 %v681, %v443
        %v957 = vmul.f32 %v681, %v444
        %v958 = vmul.f32 %v681, %v445
        %v959 = vmul.f32 %v681, %v446
        %v960 = vmul.f32 %v681, %v447
        %v961 = vmul.f32 %v681, %v448
        %v962 = vmul.f32 %v681, %v449
        %v963 = vmul.f32 %v681, %v450
        %v964 = vmul.f32 %v681, %v451
        %v965 = vmul.f32 %v681, %v452
        %v966 = vmul.f32 %v681, %v453
        %v967 = vmul.f32 %v681, %v454
        %v968 = vmul.f32 %v681, %v455
        %v969 = vmul.f32 %v681, %v456
        %v970 = vmul.f32 %v681, %v457
        %v971 = vmul.f32 %v681, %v458
        %v972 = vmul.f32 %v681, %v459
        %v973 = vmul.f32 %v681, %v460
        %v974 = vmul.f32 %v681, %v461
        %v975 = vmul.f32 %v681, %v462
        %v976 = vmul.f32 %v681, %v463
        %v977 = vmul.f32 %v681, %v464
        %v978 = vmul.f32 %v681, %v465
        %v979 = vmul.f32 %v681, %v466
        %v980 = vmul.f32 %v681, %v467
        %v981 = vmul.f32 %v681, %v468
        %v982 = vmul.f32 %v681, %v469
        %v983 = vmul.f32 %v681, %v470
        %v984 = vmul.f32 %v681, %v471
        %v985 = vmul.f32 %v681, %v472
        %v986 = vmul.f32 %v681, %v473
        %v987 = vmul.f32 %v681, %v474
        %v988 = vmul.f32 %v681, %v475
        %v989 = vmul.f32 %v681, %v476
        %v990 = vmul.f32 %v681, %v477
        %v991 = vmul.f32 %v681, %v478
        %v992 = vmul.f32 %v681, %v479
        %v993 = vmul.f32 %v681, %v480
        %v994 = vmul.f32 %v681, %v481
        %v995 = vmul.f32 %v681, %v482
        %v996 = vmul.f32 %v681, %v483
        %v997 = vmul.f32 %v681, %v484
        %v998 = vmul.f32 %v681, %v485
        %v999 = vmul.f32 %v681, %v486
        %v1000 = vmul.f32 %v681, %v487
        %v1001 = vmul.f32 %v681, %v488
        %v1002 = vmul.f32 %v681, %v489
        %v1003 = vmul.f32 %v681, %v490
        %v1004 = vmul.f32 %v681, %v491
        %v1005 = vmul.f32 %v681, %v492
        %v1006 = vmul.f32 %v681, %v493
        %v1007 = vmul.f32 %v681, %v494
        %v1008 = vmul.f32 %v681, %v495
        %v1009 = vmul.f32 %v681, %v496
        %v1010 = vmul.f32 %v681, %v497
        %v1011 = vmul.f32 %v681, %v498
        %v1012 = vmul.f32 %v681, %v499
        %v1013 = vmul.f32 %v681, %v500
        %v1014 = vmul.f32 %v681, %v501
        %v1015 = vmul.f32 %v681, %v502
        %v1016 = vmul.f32 %v681, %v503
        %v1017 = vmul.f32 %v681, %v504
        %v1018 = vmul.f32 %v681, %v505
        %v1019 = vmul.f32 %v681, %v506
        %v1020 = vmul.f32 %v681, %v507
        %v1021 = vmul.f32 %v681, %v508
        %v1022 = vmul.f32 %v681, %v509
        %v1023 = vmul.f32 %v681, %v510
        %v1024 = vmul.f32 %v681, %v511
        %v1025 = vmul.f32 %v681, %v512
        %v1026 = vmul.f32 %v681, %v513
        %v1027 = vmul.f32 %v681, %v514
        %v1028 = vmul.f32 %v681, %v515
        %v1029 = vmul.f32 %v681, %v516
        %v1030 = vmul.f32 %v681, %v517
        %v1031 = vmul.f32 %v681, %v518
        %v1032 = vmul.f32 %v681, %v519
        %v1033 = vmul.f32 %v681, %v520
        %v1034 = vmul.f32 %v681, %v521
        %v1035 = vmul.f32 %v681, %v522
        %v1036 = vmul.f32 %v681, %v523
        %v1037 = vmul.f32 %v681, %v524
        %v1038 = vmul.f32 %v681, %v525
        %v1039 = vmul.f32 %v681, %v526
        %v1040 = vmul.f32 %v681, %v527
        %v1041 = vmul.f32 %v681, %v528
        %v1042 = vmul.f32 %v681, %v529
        %v1043 = vmul.f32 %v681, %v530
        %v1044 = vmul.f32 %v681, %v531
        %v1045 = vmul.f32 %v681, %v532
        %v1046 = vmul.f32 %v681, %v533
        %v1047 = vmul.f32 %v681, %v534
        %v1048 = vmul.f32 %v681, %v535
        %v1049 = vmul.f32 %v681, %v536
        %v1050 = vmul.f32 %v681, %v537
        %v1051 = vmul.f32 %v681, %v538
        %v1052 = vmul.f32 %v681, %v539
        %v1053 = vmul.f32 %v681, %v540
        %v1054 = vmul.f32 %v681, %v541
        %v1055 = vmul.f32 %v681, %v542
        %v1056 = vmul.f32 %v681, %v543
        %v1057 = vmul.f32 %v681, %v544
        %v1058 = vmul.f32 %v681, %v545
        %v1059 = vmul.f32 %v681, %v546
        %v1060 = vmul.f32 %v681, %v547
        %v1061 = vmul.f32 %v681, %v548
        %v1062 = vmul.f32 %v681, %v549
        %v1063 = vmul.f32 %v681, %v550
        %v1064 = vmul.f32 %v681, %v551
        %v1065 = vmul.f32 %v681, %v552
        %v1066 = vmul.f32 %v681, %v553
        %v1067 = vmul.f32 %v681, %v554
        %v1068 = vmul.f32 %v681, %v555
        %v1069 = vmul.f32 %v681, %v556
        %v1070 = vmul.f32 %v681, %v557
        %v1071 = vmul.f32 %v681, %v558
        %v1072 = vmul.f32 %v681, %v559
        %v1073 = vmul.f32 %v681, %v560
        %v1074 = vmul.f32 %v681, %v561
        %v1075 = vmul.f32 %v681, %v562
        %v1076 = vmul.f32 %v681, %v563
        %v1077 = vmul.f32 %v681, %v564
        %v1078 = vmul.f32 %v681, %v565
        %v1079 = vmul.f32 %v681, %v566
        %v1080 = vmul.f32 %v681, %v567
        %v1081 = vmul.f32 %v681, %v568
        %v1082 = vmul.f32 %v681, %v569
        %v1083 = vmul.f32 %v681, %v570
        %v1084 = vmul.f32 %v681, %v571
        %v1085 = vmul.f32 %v681, %v572
        %v1086 = vmul.f32 %v681, %v573
        %v1087 = vmul.f32 %v681, %v574
        %v1088 = vmul.f32 %v681, %v575
        %v1089 = vmul.f32 %v681, %v576
        %v1090 = vmul.f32 %v681, %v577
        %v1091 = vmul.f32 %v681, %v578
        %v1092 = vmul.f32 %v681, %v579
        %v1093 = vmul.f32 %v681, %v580
        %v1094 = vmul.f32 %v681, %v581
        %v1095 = vmul.f32 %v681, %v582
        %v1096 = vmul.f32 %v681, %v583
        %v1097 = vmul.f32 %v681, %v584
        %v1098 = vmul.f32 %v681, %v585
        %v1099 = vmul.f32 %v681, %v586
        %v1100 = vmul.f32 %v681, %v587
        %v1101 = vmul.f32 %v681, %v588
        %v1102 = vmul.f32 %v681, %v589
        %v1103 = vmul.f32 %v681, %v590
        %v1104 = vmul.f32 %v681, %v591
        %v1105 = vmul.f32 %v681, %v592
        %v1106 = vmul.f32 %v681, %v593
        %v1107 = vmul.f32 %v681, %v594
        %v1108 = vmul.f32 %v681, %v595
        %v1109 = vmul.f32 %v681, %v596
        %v1110 = vmul.f32 %v681, %v597
        %v1111 = vmul.f32 %v681, %v598
        %v1112 = vmul.f32 %v681, %v599
        %v1113 = vmul.f32 %v681, %v600
        %v1114 = vmul.f32 %v681, %v601
        %v1115 = vmul.f32 %v681, %v602
        %v1116 = vmul.f32 %v681, %v603
        %v1117 = vmul.f32 %v681, %v604
        %v1118 = vmul.f32 %v681, %v605
        %v1119 = vmul.f32 %v681, %v606
        %v1120 = vmul.f32 %v681, %v607
        %v1121 = vmul.f32 %v681, %v608
        %v1122 = vmul.f32 %v681, %v609
        %v1123 = vmul.f32 %v681, %v610
        %v1124 = vmul.f32 %v681, %v611
        %v1125 = vmul.f32 %v681, %v612
        %v1126 = vmul.f32 %v681, %v613
        %v1127 = vmul.f32 %v681, %v614
        %v1128 = vmul.f32 %v681, %v615
        %v1129 = vmul.f32 %v681, %v616
        %v1130 = vmul.f32 %v681, %v617
        %v1131 = vmul.f32 %v681, %v618
        %v1132 = vmul.f32 %v681, %v619
        %v1133 = vmul.f32 %v681, %v620
        %v1134 = vmul.f32 %v681, %v621
        %v1135 = vmul.f32 %v681, %v622
        %v1136 = vmul.f32 %v681, %v623
        %v1137 = vmul.f32 %v681, %v624
        %v1138 = vmul.f32 %v681, %v625
        %v1139 = vmul.f32 %v681, %v626
        %v1140 = vmul.f32 %v681, %v627
        %v1141 = vmul.f32 %v681, %v628
        %v1142 = vmul.f32 %v681, %v629
        %v1143 = vmul.f32 %v681, %v630
        %v1144 = vmul.f32 %v681, %v631
        %v1145 = vmul.f32 %v681, %v632
        %v1146 = vmul.f32 %v681, %v633
        %v1147 = vmul.f32 %v681, %v634
        %v1148 = vmul.f32 %v681, %v635
        %v1149 = vmul.f32 %v681, %v636
        %v1150 = vmul.f32 %v681, %v637
        %v1151 = vmul.f32 %v681, %v638
        %v1152 = vmul.f32 %v681, %v639
        %v1153 = vmul.f32 %v681, %v640
        %v1154 = vmul.f32 %v681, %v641
        %v1155 = vmul.f32 %v681, %v642
        %v1156 = vmul.f32 %v681, %v643
        %v1157 = vmul.f32 %v681, %v644
        %v1158 = vmul.f32 %v681, %v645
        %v1159 = vmul.f32 %v681, %v646
        %v1160 = vmul.f32 %v681, %v647
        %v1161 = vmul.f32 %v681, %v648
        %v1162 = vmul.f32 %v681, %v649
        %v1163 = vmul.f32 %v681, %v650
        %v1164 = vmul.f32 %v681, %v651
        %v1165 = vmul.f32 %v681, %v652
        %v1166 = vmul.f32 %v681, %v653
        %v1167 = vmul.f32 %v681, %v654
        %v1168 = vmul.f32 %v681, %v655
        %v1169 = vmul.f32 %v681, %v656
        %v1170 = vmul.f32 %v681, %v657
        %v1171 = vmul.f32 %v681, %v658
        %v1172 = vmul.f32 %v681, %v659
        %v1173 = vmul.f32 %v681, %v660
        %v1174 = vmul.f32 %v681, %v661
        %v1175 = vmul.f32 %v681, %v662
        %v1176 = vmul.f32 %v681, %v663
        %v1177 = vmul.f32 %v681, %v664
        %v1178 = vmul.f32 %v681, %v665
        %v1179 = vmul.f32 %v681, %v666
        %v1180 = vmul.f32 %v681, %v667
        %v1181 = vmul.f32 %v681, %v668
        %v1182 = vmul.f32 %v681, %v669
        %v1183 = vmul.f32 %v681, %v670
        %v1184 = vmul.f32 %v681, %v671
        %v1185 = vmul.f32 %v681, %v672
        %v1186 = vmul.f32 %v681, %v673
        %v1187 = vmul.f32 %v681, %v674
        %v1188 = vmul.f32 %v681, %v675
        %v1189 = vmul.f32 %v681, %v676
        %v1190 = vmul.f32 %v681, %v677
        %v1191 = vmul.f32 %v681, %v678
        %v1192 = vmul.f32 %v681, %v679
        %v1193 = vmul.f32 %v681, %v680
        %1194 = vst [vmem:[%s165] sm:$0xff] %v682
        %1195 = vst [vmem:[%s165 + $0x8] sm:$0xff] %v683
        %1196 = vst [vmem:[%s165 + $0x10] sm:$0xff] %v684
        %1197 = vst [vmem:[%s165 + $0x18] sm:$0xff] %v685
        %1198 = vst [vmem:[%s165 + $0x20] sm:$0xff] %v686
        %1199 = vst [vmem:[%s165 + $0x28] sm:$0xff] %v687
        %1200 = vst [vmem:[%s165 + $0x30] sm:$0xff] %v688
        %1201 = vst [vmem:[%s165 + $0x38] sm:$0xff] %v689
        %1202 = vst [vmem:[%s165 + $0x40] sm:$0xff] %v690
        %1203 = vst [vmem:[%s165 + $0x48] sm:$0xff] %v691
        %1204 = vst [vmem:[%s165 + $0x50] sm:$0xff] %v692
        %1205 = vst [vmem:[%s165 + $0x58] sm:$0xff] %v693
        %1206 = vst [vmem:[%s165 + $0x60] sm:$0xff] %v694
        %1207 = vst [vmem:[%s165 + $0x68] sm:$0xff] %v695
        %1208 = vst [vmem:[%s165 + $0x70] sm:$0xff] %v696
        %1209 = vst [vmem:[%s165 + $0x78] sm:$0xff] %v697
        %1210 = vst [vmem:[%s165 + $0x80] sm:$0xff] %v698
        %1211 = vst [vmem:[%s165 + $0x88] sm:$0xff] %v699
        %1212 = vst [vmem:[%s165 + $0x90] sm:$0xff] %v700
        %1213 = vst [vmem:[%s165 + $0x98] sm:$0xff] %v701
        %1214 = vst [vmem:[%s165 + $0xa0] sm:$0xff] %v702
        %1215 = vst [vmem:[%s165 + $0xa8] sm:$0xff] %v703
        %1216 = vst [vmem:[%s165 + $0xb0] sm:$0xff] %v704
        %1217 = vst [vmem:[%s165 + $0xb8] sm:$0xff] %v705
        %1218 = vst [vmem:[%s165 + $0xc0] sm:$0xff] %v706
        %1219 = vst [vmem:[%s165 + $0xc8] sm:$0xff] %v707
        %1220 = vst [vmem:[%s165 + $0xd0] sm:$0xff] %v708
        %1221 = vst [vmem:[%s165 + $0xd8] sm:$0xff] %v709
        %1222 = vst [vmem:[%s165 + $0xe0] sm:$0xff] %v710
        %1223 = vst [vmem:[%s165 + $0xe8] sm:$0xff] %v711
        %1224 = vst [vmem:[%s165 + $0xf0] sm:$0xff] %v712
        %1225 = vst [vmem:[%s165 + $0xf8] sm:$0xff] %v713
        %1226 = vst [vmem:[%s165 + $0x100] sm:$0xff] %v714
        %1227 = vst [vmem:[%s165 + $0x108] sm:$0xff] %v715
        %1228 = vst [vmem:[%s165 + $0x110] sm:$0xff] %v716
        %1229 = vst [vmem:[%s165 + $0x118] sm:$0xff] %v717
        %1230 = vst [vmem:[%s165 + $0x120] sm:$0xff] %v718
        %1231 = vst [vmem:[%s165 + $0x128] sm:$0xff] %v719
        %1232 = vst [vmem:[%s165 + $0x130] sm:$0xff] %v720
        %1233 = vst [vmem:[%s165 + $0x138] sm:$0xff] %v721
        %1234 = vst [vmem:[%s165 + $0x140] sm:$0xff] %v722
        %1235 = vst [vmem:[%s165 + $0x148] sm:$0xff] %v723
        %1236 = vst [vmem:[%s165 + $0x150] sm:$0xff] %v724
        %1237 = vst [vmem:[%s165 + $0x158] sm:$0xff] %v725
        %1238 = vst [vmem:[%s165 + $0x160] sm:$0xff] %v726
        %1239 = vst [vmem:[%s165 + $0x168] sm:$0xff] %v727
        %1240 = vst [vmem:[%s165 + $0x170] sm:$0xff] %v728
        %1241 = vst [vmem:[%s165 + $0x178] sm:$0xff] %v729
        %1242 = vst [vmem:[%s165 + $0x180] sm:$0xff] %v730
        %1243 = vst [vmem:[%s165 + $0x188] sm:$0xff] %v731
        %1244 = vst [vmem:[%s165 + $0x190] sm:$0xff] %v732
        %1245 = vst [vmem:[%s165 + $0x198] sm:$0xff] %v733
        %1246 = vst [vmem:[%s165 + $0x1a0] sm:$0xff] %v734
        %1247 = vst [vmem:[%s165 + $0x1a8] sm:$0xff] %v735
        %1248 = vst [vmem:[%s165 + $0x1b0] sm:$0xff] %v736
        %1249 = vst [vmem:[%s165 + $0x1b8] sm:$0xff] %v737
        %1250 = vst [vmem:[%s165 + $0x1c0] sm:$0xff] %v738
        %1251 = vst [vmem:[%s165 + $0x1c8] sm:$0xff] %v739
        %1252 = vst [vmem:[%s165 + $0x1d0] sm:$0xff] %v740
        %1253 = vst [vmem:[%s165 + $0x1d8] sm:$0xff] %v741
        %1254 = vst [vmem:[%s165 + $0x1e0] sm:$0xff] %v742
        %1255 = vst [vmem:[%s165 + $0x1e8] sm:$0xff] %v743
        %1256 = vst [vmem:[%s165 + $0x1f0] sm:$0xff] %v744
        %1257 = vst [vmem:[%s165 + $0x1f8] sm:$0xff] %v745
        %1258 = vst [vmem:[%s165 + $0x200] sm:$0xff] %v746
        %1259 = vst [vmem:[%s165 + $0x208] sm:$0xff] %v747
        %1260 = vst [vmem:[%s165 + $0x210] sm:$0xff] %v748
        %1261 = vst [vmem:[%s165 + $0x218] sm:$0xff] %v749
        %1262 = vst [vmem:[%s165 + $0x220] sm:$0xff] %v750
        %1263 = vst [vmem:[%s165 + $0x228] sm:$0xff] %v751
        %1264 = vst [vmem:[%s165 + $0x230] sm:$0xff] %v752
        %1265 = vst [vmem:[%s165 + $0x238] sm:$0xff] %v753
        %1266 = vst [vmem:[%s165 + $0x240] sm:$0xff] %v754
        %1267 = vst [vmem:[%s165 + $0x248] sm:$0xff] %v755
        %1268 = vst [vmem:[%s165 + $0x250] sm:$0xff] %v756
        %1269 = vst [vmem:[%s165 + $0x258] sm:$0xff] %v757
        %1270 = vst [vmem:[%s165 + $0x260] sm:$0xff] %v758
        %1271 = vst [vmem:[%s165 + $0x268] sm:$0xff] %v759
        %1272 = vst [vmem:[%s165 + $0x270] sm:$0xff] %v760
        %1273 = vst [vmem:[%s165 + $0x278] sm:$0xff] %v761
        %1274 = vst [vmem:[%s165 + $0x280] sm:$0xff] %v762
        %1275 = vst [vmem:[%s165 + $0x288] sm:$0xff] %v763
        %1276 = vst [vmem:[%s165 + $0x290] sm:$0xff] %v764
        %1277 = vst [vmem:[%s165 + $0x298] sm:$0xff] %v765
        %1278 = vst [vmem:[%s165 + $0x2a0] sm:$0xff] %v766
        %1279 = vst [vmem:[%s165 + $0x2a8] sm:$0xff] %v767
        %1280 = vst [vmem:[%s165 + $0x2b0] sm:$0xff] %v768
        %1281 = vst [vmem:[%s165 + $0x2b8] sm:$0xff] %v769
        %1282 = vst [vmem:[%s165 + $0x2c0] sm:$0xff] %v770
        %1283 = vst [vmem:[%s165 + $0x2c8] sm:$0xff] %v771
        %1284 = vst [vmem:[%s165 + $0x2d0] sm:$0xff] %v772
        %1285 = vst [vmem:[%s165 + $0x2d8] sm:$0xff] %v773
        %1286 = vst [vmem:[%s165 + $0x2e0] sm:$0xff] %v774
        %1287 = vst [vmem:[%s165 + $0x2e8] sm:$0xff] %v775
        %1288 = vst [vmem:[%s165 + $0x2f0] sm:$0xff] %v776
        %1289 = vst [vmem:[%s165 + $0x2f8] sm:$0xff] %v777
        %1290 = vst [vmem:[%s165 + $0x300] sm:$0xff] %v778
        %1291 = vst [vmem:[%s165 + $0x308] sm:$0xff] %v779
        %1292 = vst [vmem:[%s165 + $0x310] sm:$0xff] %v780
        %1293 = vst [vmem:[%s165 + $0x318] sm:$0xff] %v781
        %1294 = vst [vmem:[%s165 + $0x320] sm:$0xff] %v782
        %1295 = vst [vmem:[%s165 + $0x328] sm:$0xff] %v783
        %1296 = vst [vmem:[%s165 + $0x330] sm:$0xff] %v784
        %1297 = vst [vmem:[%s165 + $0x338] sm:$0xff] %v785
        %1298 = vst [vmem:[%s165 + $0x340] sm:$0xff] %v786
        %1299 = vst [vmem:[%s165 + $0x348] sm:$0xff] %v787
        %1300 = vst [vmem:[%s165 + $0x350] sm:$0xff] %v788
        %1301 = vst [vmem:[%s165 + $0x358] sm:$0xff] %v789
        %1302 = vst [vmem:[%s165 + $0x360] sm:$0xff] %v790
        %1303 = vst [vmem:[%s165 + $0x368] sm:$0xff] %v791
        %1304 = vst [vmem:[%s165 + $0x370] sm:$0xff] %v792
        %1305 = vst [vmem:[%s165 + $0x378] sm:$0xff] %v793
        %1306 = vst [vmem:[%s165 + $0x380] sm:$0xff] %v794
        %1307 = vst [vmem:[%s165 + $0x388] sm:$0xff] %v795
        %1308 = vst [vmem:[%s165 + $0x390] sm:$0xff] %v796
        %1309 = vst [vmem:[%s165 + $0x398] sm:$0xff] %v797
        %1310 = vst [vmem:[%s165 + $0x3a0] sm:$0xff] %v798
        %1311 = vst [vmem:[%s165 + $0x3a8] sm:$0xff] %v799
        %1312 = vst [vmem:[%s165 + $0x3b0] sm:$0xff] %v800
        %1313 = vst [vmem:[%s165 + $0x3b8] sm:$0xff] %v801
        %1314 = vst [vmem:[%s165 + $0x3c0] sm:$0xff] %v802
        %1315 = vst [vmem:[%s165 + $0x3c8] sm:$0xff] %v803
        %1316 = vst [vmem:[%s165 + $0x3d0] sm:$0xff] %v804
        %1317 = vst [vmem:[%s165 + $0x3d8] sm:$0xff] %v805
        %1318 = vst [vmem:[%s165 + $0x3e0] sm:$0xff] %v806
        %1319 = vst [vmem:[%s165 + $0x3e8] sm:$0xff] %v807
        %1320 = vst [vmem:[%s165 + $0x3f0] sm:$0xff] %v808
        %1321 = vst [vmem:[%s165 + $0x3f8] sm:$0xff] %v809
        %1322 = vst [vmem:[%s165 + $0x400] sm:$0xff] %v810
        %1323 = vst [vmem:[%s165 + $0x408] sm:$0xff] %v811
        %1324 = vst [vmem:[%s165 + $0x410] sm:$0xff] %v812
        %1325 = vst [vmem:[%s165 + $0x418] sm:$0xff] %v813
        %1326 = vst [vmem:[%s165 + $0x420] sm:$0xff] %v814
        %1327 = vst [vmem:[%s165 + $0x428] sm:$0xff] %v815
        %1328 = vst [vmem:[%s165 + $0x430] sm:$0xff] %v816
        %1329 = vst [vmem:[%s165 + $0x438] sm:$0xff] %v817
        %1330 = vst [vmem:[%s165 + $0x440] sm:$0xff] %v818
        %1331 = vst [vmem:[%s165 + $0x448] sm:$0xff] %v819
        %1332 = vst [vmem:[%s165 + $0x450] sm:$0xff] %v820
        %1333 = vst [vmem:[%s165 + $0x458] sm:$0xff] %v821
        %1334 = vst [vmem:[%s165 + $0x460] sm:$0xff] %v822
        %1335 = vst [vmem:[%s165 + $0x468] sm:$0xff] %v823
        %1336 = vst [vmem:[%s165 + $0x470] sm:$0xff] %v824
        %1337 = vst [vmem:[%s165 + $0x478] sm:$0xff] %v825
        %1338 = vst [vmem:[%s165 + $0x480] sm:$0xff] %v826
        %1339 = vst [vmem:[%s165 + $0x488] sm:$0xff] %v827
        %1340 = vst [vmem:[%s165 + $0x490] sm:$0xff] %v828
        %1341 = vst [vmem:[%s165 + $0x498] sm:$0xff] %v829
        %1342 = vst [vmem:[%s165 + $0x4a0] sm:$0xff] %v830
        %1343 = vst [vmem:[%s165 + $0x4a8] sm:$0xff] %v831
        %1344 = vst [vmem:[%s165 + $0x4b0] sm:$0xff] %v832
        %1345 = vst [vmem:[%s165 + $0x4b8] sm:$0xff] %v833
        %1346 = vst [vmem:[%s165 + $0x4c0] sm:$0xff] %v834
        %1347 = vst [vmem:[%s165 + $0x4c8] sm:$0xff] %v835
        %1348 = vst [vmem:[%s165 + $0x4d0] sm:$0xff] %v836
        %1349 = vst [vmem:[%s165 + $0x4d8] sm:$0xff] %v837
        %1350 = vst [vmem:[%s165 + $0x4e0] sm:$0xff] %v838
        %1351 = vst [vmem:[%s165 + $0x4e8] sm:$0xff] %v839
        %1352 = vst [vmem:[%s165 + $0x4f0] sm:$0xff] %v840
        %1353 = vst [vmem:[%s165 + $0x4f8] sm:$0xff] %v841
        %1354 = vst [vmem:[%s165 + $0x500] sm:$0xff] %v842
        %1355 = vst [vmem:[%s165 + $0x508] sm:$0xff] %v843
        %1356 = vst [vmem:[%s165 + $0x510] sm:$0xff] %v844
        %1357 = vst [vmem:[%s165 + $0x518] sm:$0xff] %v845
        %1358 = vst [vmem:[%s165 + $0x520] sm:$0xff] %v846
        %1359 = vst [vmem:[%s165 + $0x528] sm:$0xff] %v847
        %1360 = vst [vmem:[%s165 + $0x530] sm:$0xff] %v848
        %1361 = vst [vmem:[%s165 + $0x538] sm:$0xff] %v849
        %1362 = vst [vmem:[%s165 + $0x540] sm:$0xff] %v850
        %1363 = vst [vmem:[%s165 + $0x548] sm:$0xff] %v851
        %1364 = vst [vmem:[%s165 + $0x550] sm:$0xff] %v852
        %1365 = vst [vmem:[%s165 + $0x558] sm:$0xff] %v853
        %1366 = vst [vmem:[%s165 + $0x560] sm:$0xff] %v854
        %1367 = vst [vmem:[%s165 + $0x568] sm:$0xff] %v855
        %1368 = vst [vmem:[%s165 + $0x570] sm:$0xff] %v856
        %1369 = vst [vmem:[%s165 + $0x578] sm:$0xff] %v857
        %1370 = vst [vmem:[%s165 + $0x580] sm:$0xff] %v858
        %1371 = vst [vmem:[%s165 + $0x588] sm:$0xff] %v859
        %1372 = vst [vmem:[%s165 + $0x590] sm:$0xff] %v860
        %1373 = vst [vmem:[%s165 + $0x598] sm:$0xff] %v861
        %1374 = vst [vmem:[%s165 + $0x5a0] sm:$0xff] %v862
        %1375 = vst [vmem:[%s165 + $0x5a8] sm:$0xff] %v863
        %1376 = vst [vmem:[%s165 + $0x5b0] sm:$0xff] %v864
        %1377 = vst [vmem:[%s165 + $0x5b8] sm:$0xff] %v865
        %1378 = vst [vmem:[%s165 + $0x5c0] sm:$0xff] %v866
        %1379 = vst [vmem:[%s165 + $0x5c8] sm:$0xff] %v867
        %1380 = vst [vmem:[%s165 + $0x5d0] sm:$0xff] %v868
        %1381 = vst [vmem:[%s165 + $0x5d8] sm:$0xff] %v869
        %1382 = vst [vmem:[%s165 + $0x5e0] sm:$0xff] %v870
        %1383 = vst [vmem:[%s165 + $0x5e8] sm:$0xff] %v871
        %1384 = vst [vmem:[%s165 + $0x5f0] sm:$0xff] %v872
        %1385 = vst [vmem:[%s165 + $0x5f8] sm:$0xff] %v873
        %1386 = vst [vmem:[%s165 + $0x600] sm:$0xff] %v874
        %1387 = vst [vmem:[%s165 + $0x608] sm:$0xff] %v875
        %1388 = vst [vmem:[%s165 + $0x610] sm:$0xff] %v876
        %1389 = vst [vmem:[%s165 + $0x618] sm:$0xff] %v877
        %1390 = vst [vmem:[%s165 + $0x620] sm:$0xff] %v878
        %1391 = vst [vmem:[%s165 + $0x628] sm:$0xff] %v879
        %1392 = vst [vmem:[%s165 + $0x630] sm:$0xff] %v880
        %1393 = vst [vmem:[%s165 + $0x638] sm:$0xff] %v881
        %1394 = vst [vmem:[%s165 + $0x640] sm:$0xff] %v882
        %1395 = vst [vmem:[%s165 + $0x648] sm:$0xff] %v883
        %1396 = vst [vmem:[%s165 + $0x650] sm:$0xff] %v884
        %1397 = vst [vmem:[%s165 + $0x658] sm:$0xff] %v885
        %1398 = vst [vmem:[%s165 + $0x660] sm:$0xff] %v886
        %1399 = vst [vmem:[%s165 + $0x668] sm:$0xff] %v887
        %1400 = vst [vmem:[%s165 + $0x670] sm:$0xff] %v888
        %1401 = vst [vmem:[%s165 + $0x678] sm:$0xff] %v889
        %1402 = vst [vmem:[%s165 + $0x680] sm:$0xff] %v890
        %1403 = vst [vmem:[%s165 + $0x688] sm:$0xff] %v891
        %1404 = vst [vmem:[%s165 + $0x690] sm:$0xff] %v892
        %1405 = vst [vmem:[%s165 + $0x698] sm:$0xff] %v893
        %1406 = vst [vmem:[%s165 + $0x6a0] sm:$0xff] %v894
        %1407 = vst [vmem:[%s165 + $0x6a8] sm:$0xff] %v895
        %1408 = vst [vmem:[%s165 + $0x6b0] sm:$0xff] %v896
        %1409 = vst [vmem:[%s165 + $0x6b8] sm:$0xff] %v897
        %1410 = vst [vmem:[%s165 + $0x6c0] sm:$0xff] %v898
        %1411 = vst [vmem:[%s165 + $0x6c8] sm:$0xff] %v899
        %1412 = vst [vmem:[%s165 + $0x6d0] sm:$0xff] %v900
        %1413 = vst [vmem:[%s165 + $0x6d8] sm:$0xff] %v901
        %1414 = vst [vmem:[%s165 + $0x6e0] sm:$0xff] %v902
        %1415 = vst [vmem:[%s165 + $0x6e8] sm:$0xff] %v903
        %1416 = vst [vmem:[%s165 + $0x6f0] sm:$0xff] %v904
        %1417 = vst [vmem:[%s165 + $0x6f8] sm:$0xff] %v905
        %1418 = vst [vmem:[%s165 + $0x700] sm:$0xff] %v906
        %1419 = vst [vmem:[%s165 + $0x708] sm:$0xff] %v907
        %1420 = vst [vmem:[%s165 + $0x710] sm:$0xff] %v908
        %1421 = vst [vmem:[%s165 + $0x718] sm:$0xff] %v909
        %1422 = vst [vmem:[%s165 + $0x720] sm:$0xff] %v910
        %1423 = vst [vmem:[%s165 + $0x728] sm:$0xff] %v911
        %1424 = vst [vmem:[%s165 + $0x730] sm:$0xff] %v912
        %1425 = vst [vmem:[%s165 + $0x738] sm:$0xff] %v913
        %1426 = vst [vmem:[%s165 + $0x740] sm:$0xff] %v914
        %1427 = vst [vmem:[%s165 + $0x748] sm:$0xff] %v915
        %1428 = vst [vmem:[%s165 + $0x750] sm:$0xff] %v916
        %1429 = vst [vmem:[%s165 + $0x758] sm:$0xff] %v917
        %1430 = vst [vmem:[%s165 + $0x760] sm:$0xff] %v918
        %1431 = vst [vmem:[%s165 + $0x768] sm:$0xff] %v919
        %1432 = vst [vmem:[%s165 + $0x770] sm:$0xff] %v920
        %1433 = vst [vmem:[%s165 + $0x778] sm:$0xff] %v921
        %1434 = vst [vmem:[%s165 + $0x780] sm:$0xff] %v922
        %1435 = vst [vmem:[%s165 + $0x788] sm:$0xff] %v923
        %1436 = vst [vmem:[%s165 + $0x790] sm:$0xff] %v924
        %1437 = vst [vmem:[%s165 + $0x798] sm:$0xff] %v925
        %1438 = vst [vmem:[%s165 + $0x7a0] sm:$0xff] %v926
        %1439 = vst [vmem:[%s165 + $0x7a8] sm:$0xff] %v927
        %1440 = vst [vmem:[%s165 + $0x7b0] sm:$0xff] %v928
        %1441 = vst [vmem:[%s165 + $0x7b8] sm:$0xff] %v929
        %1442 = vst [vmem:[%s165 + $0x7c0] sm:$0xff] %v930
        %1443 = vst [vmem:[%s165 + $0x7c8] sm:$0xff] %v931
        %1444 = vst [vmem:[%s165 + $0x7d0] sm:$0xff] %v932
        %1445 = vst [vmem:[%s165 + $0x7d8] sm:$0xff] %v933
        %1446 = vst [vmem:[%s165 + $0x7e0] sm:$0xff] %v934
        %1447 = vst [vmem:[%s165 + $0x7e8] sm:$0xff] %v935
        %1448 = vst [vmem:[%s165 + $0x7f0] sm:$0xff] %v936
        %1449 = vst [vmem:[%s165 + $0x7f8] sm:$0xff] %v937
        %1450 = vst [vmem:[%s165 + $0x800] sm:$0xff] %v938
        %1451 = vst [vmem:[%s165 + $0x808] sm:$0xff] %v939
        %1452 = vst [vmem:[%s165 + $0x810] sm:$0xff] %v940
        %1453 = vst [vmem:[%s165 + $0x818] sm:$0xff] %v941
        %1454 = vst [vmem:[%s165 + $0x820] sm:$0xff] %v942
        %1455 = vst [vmem:[%s165 + $0x828] sm:$0xff] %v943
        %1456 = vst [vmem:[%s165 + $0x830] sm:$0xff] %v944
        %1457 = vst [vmem:[%s165 + $0x838] sm:$0xff] %v945
        %1458 = vst [vmem:[%s165 + $0x840] sm:$0xff] %v946
        %1459 = vst [vmem:[%s165 + $0x848] sm:$0xff] %v947
        %1460 = vst [vmem:[%s165 + $0x850] sm:$0xff] %v948
        %1461 = vst [vmem:[%s165 + $0x858] sm:$0xff] %v949
        %1462 = vst [vmem:[%s165 + $0x860] sm:$0xff] %v950
        %1463 = vst [vmem:[%s165 + $0x868] sm:$0xff] %v951
        %1464 = vst [vmem:[%s165 + $0x870] sm:$0xff] %v952
        %1465 = vst [vmem:[%s165 + $0x878] sm:$0xff] %v953
        %1466 = vst [vmem:[%s165 + $0x880] sm:$0xff] %v954
        %1467 = vst [vmem:[%s165 + $0x888] sm:$0xff] %v955
        %1468 = vst [vmem:[%s165 + $0x890] sm:$0xff] %v956
        %1469 = vst [vmem:[%s165 + $0x898] sm:$0xff] %v957
        %1470 = vst [vmem:[%s165 + $0x8a0] sm:$0xff] %v958
        %1471 = vst [vmem:[%s165 + $0x8a8] sm:$0xff] %v959
        %1472 = vst [vmem:[%s165 + $0x8b0] sm:$0xff] %v960
        %1473 = vst [vmem:[%s165 + $0x8b8] sm:$0xff] %v961
        %1474 = vst [vmem:[%s165 + $0x8c0] sm:$0xff] %v962
        %1475 = vst [vmem:[%s165 + $0x8c8] sm:$0xff] %v963
        %1476 = vst [vmem:[%s165 + $0x8d0] sm:$0xff] %v964
        %1477 = vst [vmem:[%s165 + $0x8d8] sm:$0xff] %v965
        %1478 = vst [vmem:[%s165 + $0x8e0] sm:$0xff] %v966
        %1479 = vst [vmem:[%s165 + $0x8e8] sm:$0xff] %v967
        %1480 = vst [vmem:[%s165 + $0x8f0] sm:$0xff] %v968
        %1481 = vst [vmem:[%s165 + $0x8f8] sm:$0xff] %v969
        %1482 = vst [vmem:[%s165 + $0x900] sm:$0xff] %v970
        %1483 = vst [vmem:[%s165 + $0x908] sm:$0xff] %v971
        %1484 = vst [vmem:[%s165 + $0x910] sm:$0xff] %v972
        %1485 = vst [vmem:[%s165 + $0x918] sm:$0xff] %v973
        %1486 = vst [vmem:[%s165 + $0x920] sm:$0xff] %v974
        %1487 = vst [vmem:[%s165 + $0x928] sm:$0xff] %v975
        %1488 = vst [vmem:[%s165 + $0x930] sm:$0xff] %v976
        %1489 = vst [vmem:[%s165 + $0x938] sm:$0xff] %v977
        %1490 = vst [vmem:[%s165 + $0x940] sm:$0xff] %v978
        %1491 = vst [vmem:[%s165 + $0x948] sm:$0xff] %v979
        %1492 = vst [vmem:[%s165 + $0x950] sm:$0xff] %v980
        %1493 = vst [vmem:[%s165 + $0x958] sm:$0xff] %v981
        %1494 = vst [vmem:[%s165 + $0x960] sm:$0xff] %v982
        %1495 = vst [vmem:[%s165 + $0x968] sm:$0xff] %v983
        %1496 = vst [vmem:[%s165 + $0x970] sm:$0xff] %v984
        %1497 = vst [vmem:[%s165 + $0x978] sm:$0xff] %v985
        %1498 = vst [vmem:[%s165 + $0x980] sm:$0xff] %v986
        %1499 = vst [vmem:[%s165 + $0x988] sm:$0xff] %v987
        %1500 = vst [vmem:[%s165 + $0x990] sm:$0xff] %v988
        %1501 = vst [vmem:[%s165 + $0x998] sm:$0xff] %v989
        %1502 = vst [vmem:[%s165 + $0x9a0] sm:$0xff] %v990
        %1503 = vst [vmem:[%s165 + $0x9a8] sm:$0xff] %v991
        %1504 = vst [vmem:[%s165 + $0x9b0] sm:$0xff] %v992
        %1505 = vst [vmem:[%s165 + $0x9b8] sm:$0xff] %v993
        %1506 = vst [vmem:[%s165 + $0x9c0] sm:$0xff] %v994
        %1507 = vst [vmem:[%s165 + $0x9c8] sm:$0xff] %v995
        %1508 = vst [vmem:[%s165 + $0x9d0] sm:$0xff] %v996
        %1509 = vst [vmem:[%s165 + $0x9d8] sm:$0xff] %v997
        %1510 = vst [vmem:[%s165 + $0x9e0] sm:$0xff] %v998
        %1511 = vst [vmem:[%s165 + $0x9e8] sm:$0xff] %v999
        %1512 = vst [vmem:[%s165 + $0x9f0] sm:$0xff] %v1000
        %1513 = vst [vmem:[%s165 + $0x9f8] sm:$0xff] %v1001
        %1514 = vst [vmem:[%s165 + $0xa00] sm:$0xff] %v1002
        %1515 = vst [vmem:[%s165 + $0xa08] sm:$0xff] %v1003
        %1516 = vst [vmem:[%s165 + $0xa10] sm:$0xff] %v1004
        %1517 = vst [vmem:[%s165 + $0xa18] sm:$0xff] %v1005
        %1518 = vst [vmem:[%s165 + $0xa20] sm:$0xff] %v1006
        %1519 = vst [vmem:[%s165 + $0xa28] sm:$0xff] %v1007
        %1520 = vst [vmem:[%s165 + $0xa30] sm:$0xff] %v1008
        %1521 = vst [vmem:[%s165 + $0xa38] sm:$0xff] %v1009
        %1522 = vst [vmem:[%s165 + $0xa40] sm:$0xff] %v1010
        %1523 = vst [vmem:[%s165 + $0xa48] sm:$0xff] %v1011
        %1524 = vst [vmem:[%s165 + $0xa50] sm:$0xff] %v1012
        %1525 = vst [vmem:[%s165 + $0xa58] sm:$0xff] %v1013
        %1526 = vst [vmem:[%s165 + $0xa60] sm:$0xff] %v1014
        %1527 = vst [vmem:[%s165 + $0xa68] sm:$0xff] %v1015
        %1528 = vst [vmem:[%s165 + $0xa70] sm:$0xff] %v1016
        %1529 = vst [vmem:[%s165 + $0xa78] sm:$0xff] %v1017
        %1530 = vst [vmem:[%s165 + $0xa80] sm:$0xff] %v1018
        %1531 = vst [vmem:[%s165 + $0xa88] sm:$0xff] %v1019
        %1532 = vst [vmem:[%s165 + $0xa90] sm:$0xff] %v1020
        %1533 = vst [vmem:[%s165 + $0xa98] sm:$0xff] %v1021
        %1534 = vst [vmem:[%s165 + $0xaa0] sm:$0xff] %v1022
        %1535 = vst [vmem:[%s165 + $0xaa8] sm:$0xff] %v1023
        %1536 = vst [vmem:[%s165 + $0xab0] sm:$0xff] %v1024
        %1537 = vst [vmem:[%s165 + $0xab8] sm:$0xff] %v1025
        %1538 = vst [vmem:[%s165 + $0xac0] sm:$0xff] %v1026
        %1539 = vst [vmem:[%s165 + $0xac8] sm:$0xff] %v1027
        %1540 = vst [vmem:[%s165 + $0xad0] sm:$0xff] %v1028
        %1541 = vst [vmem:[%s165 + $0xad8] sm:$0xff] %v1029
        %1542 = vst [vmem:[%s165 + $0xae0] sm:$0xff] %v1030
        %1543 = vst [vmem:[%s165 + $0xae8] sm:$0xff] %v1031
        %1544 = vst [vmem:[%s165 + $0xaf0] sm:$0xff] %v1032
        %1545 = vst [vmem:[%s165 + $0xaf8] sm:$0xff] %v1033
        %1546 = vst [vmem:[%s165 + $0xb00] sm:$0xff] %v1034
        %1547 = vst [vmem:[%s165 + $0xb08] sm:$0xff] %v1035
        %1548 = vst [vmem:[%s165 + $0xb10] sm:$0xff] %v1036
        %1549 = vst [vmem:[%s165 + $0xb18] sm:$0xff] %v1037
        %1550 = vst [vmem:[%s165 + $0xb20] sm:$0xff] %v1038
        %1551 = vst [vmem:[%s165 + $0xb28] sm:$0xff] %v1039
        %1552 = vst [vmem:[%s165 + $0xb30] sm:$0xff] %v1040
        %1553 = vst [vmem:[%s165 + $0xb38] sm:$0xff] %v1041
        %1554 = vst [vmem:[%s165 + $0xb40] sm:$0xff] %v1042
        %1555 = vst [vmem:[%s165 + $0xb48] sm:$0xff] %v1043
        %1556 = vst [vmem:[%s165 + $0xb50] sm:$0xff] %v1044
        %1557 = vst [vmem:[%s165 + $0xb58] sm:$0xff] %v1045
        %1558 = vst [vmem:[%s165 + $0xb60] sm:$0xff] %v1046
        %1559 = vst [vmem:[%s165 + $0xb68] sm:$0xff] %v1047
        %1560 = vst [vmem:[%s165 + $0xb70] sm:$0xff] %v1048
        %1561 = vst [vmem:[%s165 + $0xb78] sm:$0xff] %v1049
        %1562 = vst [vmem:[%s165 + $0xb80] sm:$0xff] %v1050
        %1563 = vst [vmem:[%s165 + $0xb88] sm:$0xff] %v1051
        %1564 = vst [vmem:[%s165 + $0xb90] sm:$0xff] %v1052
        %1565 = vst [vmem:[%s165 + $0xb98] sm:$0xff] %v1053
        %1566 = vst [vmem:[%s165 + $0xba0] sm:$0xff] %v1054
        %1567 = vst [vmem:[%s165 + $0xba8] sm:$0xff] %v1055
        %1568 = vst [vmem:[%s165 + $0xbb0] sm:$0xff] %v1056
        %1569 = vst [vmem:[%s165 + $0xbb8] sm:$0xff] %v1057
        %1570 = vst [vmem:[%s165 + $0xbc0] sm:$0xff] %v1058
        %1571 = vst [vmem:[%s165 + $0xbc8] sm:$0xff] %v1059
        %1572 = vst [vmem:[%s165 + $0xbd0] sm:$0xff] %v1060
        %1573 = vst [vmem:[%s165 + $0xbd8] sm:$0xff] %v1061
        %1574 = vst [vmem:[%s165 + $0xbe0] sm:$0xff] %v1062
        %1575 = vst [vmem:[%s165 + $0xbe8] sm:$0xff] %v1063
        %1576 = vst [vmem:[%s165 + $0xbf0] sm:$0xff] %v1064
        %1577 = vst [vmem:[%s165 + $0xbf8] sm:$0xff] %v1065
        %1578 = vst [vmem:[%s165 + $0xc00] sm:$0xff] %v1066
        %1579 = vst [vmem:[%s165 + $0xc08] sm:$0xff] %v1067
        %1580 = vst [vmem:[%s165 + $0xc10] sm:$0xff] %v1068
        %1581 = vst [vmem:[%s165 + $0xc18] sm:$0xff] %v1069
        %1582 = vst [vmem:[%s165 + $0xc20] sm:$0xff] %v1070
        %1583 = vst [vmem:[%s165 + $0xc28] sm:$0xff] %v1071
        %1584 = vst [vmem:[%s165 + $0xc30] sm:$0xff] %v1072
        %1585 = vst [vmem:[%s165 + $0xc38] sm:$0xff] %v1073
        %1586 = vst [vmem:[%s165 + $0xc40] sm:$0xff] %v1074
        %1587 = vst [vmem:[%s165 + $0xc48] sm:$0xff] %v1075
        %1588 = vst [vmem:[%s165 + $0xc50] sm:$0xff] %v1076
        %1589 = vst [vmem:[%s165 + $0xc58] sm:$0xff] %v1077
        %1590 = vst [vmem:[%s165 + $0xc60] sm:$0xff] %v1078
        %1591 = vst [vmem:[%s165 + $0xc68] sm:$0xff] %v1079
        %1592 = vst [vmem:[%s165 + $0xc70] sm:$0xff] %v1080
        %1593 = vst [vmem:[%s165 + $0xc78] sm:$0xff] %v1081
        %1594 = vst [vmem:[%s165 + $0xc80] sm:$0xff] %v1082
        %1595 = vst [vmem:[%s165 + $0xc88] sm:$0xff] %v1083
        %1596 = vst [vmem:[%s165 + $0xc90] sm:$0xff] %v1084
        %1597 = vst [vmem:[%s165 + $0xc98] sm:$0xff] %v1085
        %1598 = vst [vmem:[%s165 + $0xca0] sm:$0xff] %v1086
        %1599 = vst [vmem:[%s165 + $0xca8] sm:$0xff] %v1087
        %1600 = vst [vmem:[%s165 + $0xcb0] sm:$0xff] %v1088
        %1601 = vst [vmem:[%s165 + $0xcb8] sm:$0xff] %v1089
        %1602 = vst [vmem:[%s165 + $0xcc0] sm:$0xff] %v1090
        %1603 = vst [vmem:[%s165 + $0xcc8] sm:$0xff] %v1091
        %1604 = vst [vmem:[%s165 + $0xcd0] sm:$0xff] %v1092
        %1605 = vst [vmem:[%s165 + $0xcd8] sm:$0xff] %v1093
        %1606 = vst [vmem:[%s165 + $0xce0] sm:$0xff] %v1094
        %1607 = vst [vmem:[%s165 + $0xce8] sm:$0xff] %v1095
        %1608 = vst [vmem:[%s165 + $0xcf0] sm:$0xff] %v1096
        %1609 = vst [vmem:[%s165 + $0xcf8] sm:$0xff] %v1097
        %1610 = vst [vmem:[%s165 + $0xd00] sm:$0xff] %v1098
        %1611 = vst [vmem:[%s165 + $0xd08] sm:$0xff] %v1099
        %1612 = vst [vmem:[%s165 + $0xd10] sm:$0xff] %v1100
        %1613 = vst [vmem:[%s165 + $0xd18] sm:$0xff] %v1101
        %1614 = vst [vmem:[%s165 + $0xd20] sm:$0xff] %v1102
        %1615 = vst [vmem:[%s165 + $0xd28] sm:$0xff] %v1103
        %1616 = vst [vmem:[%s165 + $0xd30] sm:$0xff] %v1104
        %1617 = vst [vmem:[%s165 + $0xd38] sm:$0xff] %v1105
        %1618 = vst [vmem:[%s165 + $0xd40] sm:$0xff] %v1106
        %1619 = vst [vmem:[%s165 + $0xd48] sm:$0xff] %v1107
        %1620 = vst [vmem:[%s165 + $0xd50] sm:$0xff] %v1108
        %1621 = vst [vmem:[%s165 + $0xd58] sm:$0xff] %v1109
        %1622 = vst [vmem:[%s165 + $0xd60] sm:$0xff] %v1110
        %1623 = vst [vmem:[%s165 + $0xd68] sm:$0xff] %v1111
        %1624 = vst [vmem:[%s165 + $0xd70] sm:$0xff] %v1112
        %1625 = vst [vmem:[%s165 + $0xd78] sm:$0xff] %v1113
        %1626 = vst [vmem:[%s165 + $0xd80] sm:$0xff] %v1114
        %1627 = vst [vmem:[%s165 + $0xd88] sm:$0xff] %v1115
        %1628 = vst [vmem:[%s165 + $0xd90] sm:$0xff] %v1116
        %1629 = vst [vmem:[%s165 + $0xd98] sm:$0xff] %v1117
        %1630 = vst [vmem:[%s165 + $0xda0] sm:$0xff] %v1118
        %1631 = vst [vmem:[%s165 + $0xda8] sm:$0xff] %v1119
        %1632 = vst [vmem:[%s165 + $0xdb0] sm:$0xff] %v1120
        %1633 = vst [vmem:[%s165 + $0xdb8] sm:$0xff] %v1121
        %1634 = vst [vmem:[%s165 + $0xdc0] sm:$0xff] %v1122
        %1635 = vst [vmem:[%s165 + $0xdc8] sm:$0xff] %v1123
        %1636 = vst [vmem:[%s165 + $0xdd0] sm:$0xff] %v1124
        %1637 = vst [vmem:[%s165 + $0xdd8] sm:$0xff] %v1125
        %1638 = vst [vmem:[%s165 + $0xde0] sm:$0xff] %v1126
        %1639 = vst [vmem:[%s165 + $0xde8] sm:$0xff] %v1127
        %1640 = vst [vmem:[%s165 + $0xdf0] sm:$0xff] %v1128
        %1641 = vst [vmem:[%s165 + $0xdf8] sm:$0xff] %v1129
        %1642 = vst [vmem:[%s165 + $0xe00] sm:$0xff] %v1130
        %1643 = vst [vmem:[%s165 + $0xe08] sm:$0xff] %v1131
        %1644 = vst [vmem:[%s165 + $0xe10] sm:$0xff] %v1132
        %1645 = vst [vmem:[%s165 + $0xe18] sm:$0xff] %v1133
        %1646 = vst [vmem:[%s165 + $0xe20] sm:$0xff] %v1134
        %1647 = vst [vmem:[%s165 + $0xe28] sm:$0xff] %v1135
        %1648 = vst [vmem:[%s165 + $0xe30] sm:$0xff] %v1136
        %1649 = vst [vmem:[%s165 + $0xe38] sm:$0xff] %v1137
        %1650 = vst [vmem:[%s165 + $0xe40] sm:$0xff] %v1138
        %1651 = vst [vmem:[%s165 + $0xe48] sm:$0xff] %v1139
        %1652 = vst [vmem:[%s165 + $0xe50] sm:$0xff] %v1140
        %1653 = vst [vmem:[%s165 + $0xe58] sm:$0xff] %v1141
        %1654 = vst [vmem:[%s165 + $0xe60] sm:$0xff] %v1142
        %1655 = vst [vmem:[%s165 + $0xe68] sm:$0xff] %v1143
        %1656 = vst [vmem:[%s165 + $0xe70] sm:$0xff] %v1144
        %1657 = vst [vmem:[%s165 + $0xe78] sm:$0xff] %v1145
        %1658 = vst [vmem:[%s165 + $0xe80] sm:$0xff] %v1146
        %1659 = vst [vmem:[%s165 + $0xe88] sm:$0xff] %v1147
        %1660 = vst [vmem:[%s165 + $0xe90] sm:$0xff] %v1148
        %1661 = vst [vmem:[%s165 + $0xe98] sm:$0xff] %v1149
        %1662 = vst [vmem:[%s165 + $0xea0] sm:$0xff] %v1150
        %1663 = vst [vmem:[%s165 + $0xea8] sm:$0xff] %v1151
        %1664 = vst [vmem:[%s165 + $0xeb0] sm:$0xff] %v1152
        %1665 = vst [vmem:[%s165 + $0xeb8] sm:$0xff] %v1153
        %1666 = vst [vmem:[%s165 + $0xec0] sm:$0xff] %v1154
        %1667 = vst [vmem:[%s165 + $0xec8] sm:$0xff] %v1155
        %1668 = vst [vmem:[%s165 + $0xed0] sm:$0xff] %v1156
        %1669 = vst [vmem:[%s165 + $0xed8] sm:$0xff] %v1157
        %1670 = vst [vmem:[%s165 + $0xee0] sm:$0xff] %v1158
        %1671 = vst [vmem:[%s165 + $0xee8] sm:$0xff] %v1159
        %1672 = vst [vmem:[%s165 + $0xef0] sm:$0xff] %v1160
        %1673 = vst [vmem:[%s165 + $0xef8] sm:$0xff] %v1161
        %1674 = vst [vmem:[%s165 + $0xf00] sm:$0xff] %v1162
        %1675 = vst [vmem:[%s165 + $0xf08] sm:$0xff] %v1163
        %1676 = vst [vmem:[%s165 + $0xf10] sm:$0xff] %v1164
        %1677 = vst [vmem:[%s165 + $0xf18] sm:$0xff] %v1165
        %1678 = vst [vmem:[%s165 + $0xf20] sm:$0xff] %v1166
        %1679 = vst [vmem:[%s165 + $0xf28] sm:$0xff] %v1167
        %1680 = vst [vmem:[%s165 + $0xf30] sm:$0xff] %v1168
        %1681 = vst [vmem:[%s165 + $0xf38] sm:$0xff] %v1169
        %1682 = vst [vmem:[%s165 + $0xf40] sm:$0xff] %v1170
        %1683 = vst [vmem:[%s165 + $0xf48] sm:$0xff] %v1171
        %1684 = vst [vmem:[%s165 + $0xf50] sm:$0xff] %v1172
        %1685 = vst [vmem:[%s165 + $0xf58] sm:$0xff] %v1173
        %1686 = vst [vmem:[%s165 + $0xf60] sm:$0xff] %v1174
        %1687 = vst [vmem:[%s165 + $0xf68] sm:$0xff] %v1175
        %1688 = vst [vmem:[%s165 + $0xf70] sm:$0xff] %v1176
        %1689 = vst [vmem:[%s165 + $0xf78] sm:$0xff] %v1177
        %1690 = vst [vmem:[%s165 + $0xf80] sm:$0xff] %v1178
        %1691 = vst [vmem:[%s165 + $0xf88] sm:$0xff] %v1179
        %1692 = vst [vmem:[%s165 + $0xf90] sm:$0xff] %v1180
        %1693 = vst [vmem:[%s165 + $0xf98] sm:$0xff] %v1181
        %1694 = vst [vmem:[%s165 + $0xfa0] sm:$0xff] %v1182
        %1695 = vst [vmem:[%s165 + $0xfa8] sm:$0xff] %v1183
        %1696 = vst [vmem:[%s165 + $0xfb0] sm:$0xff] %v1184
        %1697 = vst [vmem:[%s165 + $0xfb8] sm:$0xff] %v1185
        %1698 = vst [vmem:[%s165 + $0xfc0] sm:$0xff] %v1186
        %1699 = vst [vmem:[%s165 + $0xfc8] sm:$0xff] %v1187
        %1700 = vst [vmem:[%s165 + $0xfd0] sm:$0xff] %v1188
        %1701 = vst [vmem:[%s165 + $0xfd8] sm:$0xff] %v1189
        %1702 = vst [vmem:[%s165 + $0xfe0] sm:$0xff] %v1190
        %1703 = vst [vmem:[%s165 + $0xfe8] sm:$0xff] %v1191
        %1704 = vst [vmem:[%s165 + $0xff0] sm:$0xff] %v1192
        %1705 = vst [vmem:[%s165 + $0xff8] sm:$0xff] %v1193
        %s1706 = sand.u32 %s75, 1
        %s1707 = scalar_lea.sflag [#allocation5], %s1706
        %s1708 = sand.u32 %s75, 1
        %s1709 = smul.addr %s1708, 4096
        %s1710 = scalar_lea.vmem [#allocation6], %s1709
        // Predicated region
        $region33: #{tpu_custom_call.1} parent=27 // pred_check
          %p1711 = pneg %p85
        $region34: #{tpu_custom_call.1} parent=27 // pred_check_branch
          %1713 = sbr.rel (%p1711) target = $region36
        $region35: #{tpu_custom_call.1} parent=27 // pred_region
          %s1714 = smul.u32 8, %s20
          %1716 = vsyncadd %s1707, 0
          %s1717 = smul.addr %s1714, 64
          %s1718 = smul.addr %s1717, 8
          %s1719 = scalar_lea.hbm %s2, %s1718
          %s1720 = sshll.u32 %s1710, 4
          %s1721 = int_to_ptr.vmem [resolvable:$true] %s1720
          %s1722 = sshll.u32 %s1719, 4
          %s1723 = int_to_ptr.hbm [resolvable:$true] %s1722
          %1728 = dma.vmem_to_hbm [thread:$0]  %s1721, 65536, %s1723, %s1707, 8192, 8192, 512
        $region36: #{tpu_custom_call.1} parent=27 // pred_fallthru
          _
      $region28: #{tpu_custom_call.1} parent=5 // pred_fallthru
        _
      %p1729 = scmp.le.s32.totalorder 2, %s15
      // Predicated region
      $region37: #{tpu_custom_call.1} parent=5 // pred_check
        %p1730 = pneg %p1729
      $region38: #{tpu_custom_call.1} parent=5 // pred_check_branch
        %1732 = sbr.rel (%p1730) target = $region40
      $region39: #{tpu_custom_call.1} parent=5 // pred_region
        %s1733 = ssub.s32 %s15, 2
        // Predicated region
        $region41: #{tpu_custom_call.1} parent=39 // pred_check
          %p1734 = pneg %p91
        $region42: #{tpu_custom_call.1} parent=39 // pred_check_branch
          %1736 = sbr.rel (%p1734) target = $region44
        $region43: #{tpu_custom_call.1} parent=39 // pred_region
          %s1737 = sand.u32 %s76, 1
          %s1738 = scalar_lea.sflag [#allocation5], %s1737
          %s1739 = sand.u32 %s76, 1
          %s1740 = smul.addr %s1739, 4096
          %s1741 = scalar_lea.vmem [#allocation6], %s1740
          %1743 = dma.done %s1738, 65536
        $region44: #{tpu_custom_call.1} parent=39 // pred_fallthru
          _
      $region40: #{tpu_custom_call.1} parent=5 // pred_fallthru
        _
    $region6: #{tpu_custom_call.1} parent=1 // loop_footer
      %s19 = sadd.s32 1, %s15
    $region7: #{tpu_custom_call.1} parent=1 // loop_footer_branch
      %14 = sbr.rel target = $region3
    $region8: #{tpu_custom_call.1} parent=1 // loop_exit
      _
    %1744 = vsyncpa [#allocation4], 1
    %s1745 = scalar_lea.sflag [#allocation4], 1
    %1746 = vsyncpa %s1745, 1
    %1747 = vsyncpa [#allocation5], 1
    %s1748 = scalar_lea.sflag [#allocation5], 1
    %1749 = vsyncpa %s1748, 1

</llo_original>
